<compile_context>
chip_gen: v7x
topology: tpu7x:2x2x1
jax: 0.10.0
libtpu: 0.0.40
codegen_flags: <defaults>
</compile_context>

<pallas_src>
import math

import numpy as np

import jax
import jax.numpy as jnp
from jax import lax
from jax.experimental import pallas as pl
from jax.experimental.pallas import tpu as pltpu

# ----------------------------- model dims ----------------------------------
S = 8              # number of spectral bands (sequence length)
D = 64             # dim_proj / dim_model
H = 8              # num_heads
HD = D // H        # head dim (8)
DFF = 64           # dim_ff (== D so the FFN weights share the slab row count)
DOUT = 4           # encoder output dim (DER: gamma, nu, alpha, beta)
LN_EPS = 1e-5
BAND_MEAN = 1440.0
BAND_STD = 600.0

assert DFF == D, "weight slab packing assumes dim_ff == dim_proj"

# ------------------------ tiling / layout constants -------------------------
PIX = 2            # pixels (spectra) per grid step == one attention super-block
BS = PIX * S       # rows per grid step (16)
HB = H * BS        # block-diagonal key columns (128)
LANES = 128
FEAT_PAD = 8       # input features zero-padded 2 -> 8 for an aligned K=8 matmul
OUT_ROWS = 8       # lane-dense output block rows per grid step

NPIX_DEMO = 2      # demo batch size

# constants slab row layout (all rows 128 lanes wide, f32)
_C_G = 0                               # (128, 128) softmax grouping matrix
_C_SMASK = _C_G + HB                   # (16, 128)  additive cross-pixel mask
_C_KMASK = _C_SMASK + BS               # (64, 128)  K block-diagonal head mask
_C_VMASK = _C_KMASK + D                # (128, 128) V block-diag mask (lanes 0:64)
_C_VEC = _C_VMASK + HB                 # 12 blocks of (16, 128), lanes 0:64 valid

_V_BEMB, _V_LN1G, _V_LN1B = 0, 1, 2
_V_BQ, _V_BK, _V_BV, _V_BO = 3, 4, 5, 6
_V_LN2G, _V_LN2B, _V_B1, _V_B2, _V_BH = 7, 8, 9, 10, 11
_N_VEC = 12
C_ROWS = _C_VEC + _N_VEC * BS          # 528

# weight slab column layout (64 rows, f32)
_W_QKV = 0                             # cols   0:192  fused [Wq | Wk | Wv]
_W_O = _W_QKV + 3 * D                  # cols 192:256  Wo
_W_1 = _W_O + D                        # cols 256:320  W1
_W_2 = _W_1 + DFF                      # cols 320:384  W2
_W_H = _W_2 + D                        # cols 384:448  Wh (padded 4 -> 64)
_W_EMB = _W_H + D                      # cols 448:512  Wemb (rows 0:2 valid)
W_COLS = _W_EMB + D                    # 512


# ------------------------------ small math ----------------------------------
def _layernorm(x, g, b):
    mu = jnp.mean(x, axis=-1, keepdims=True)
    var = jnp.mean((x - mu) ** 2, axis=-1, keepdims=True)
    return (x - mu) * lax.rsqrt(var + LN_EPS) * g + b


def _gelu_exact(x):
    # PyTorch nn.GELU() default (erf-based, exact)
    return 0.5 * x * (1.0 + lax.erf(x * (1.0 / math.sqrt(2.0))))


def _softplus(x):
    return jnp.maximum(x, 0.0) + jnp.log1p(jnp.exp(-jnp.abs(x)))


# -------------------------------- kernel ------------------------------------
def spectf_der_kernel(feat_ref, c_ref, w_ref, o_ref):
    f32 = jnp.float32

    def vec(idx, nrows=BS):
        # bias/gain rows are stored pre-broadcast to BS rows -> plain vld.
        base = _C_VEC + idx * BS
        return c_ref[base:base + nrows, 0:D]

    feat = feat_ref[...]                                              # (16, 8)

    # --- BandConcat + SpectralEmbed: one (16,8)@(8,64) matmul + tanh --------
    emb = (jnp.dot(feat, w_ref[0:FEAT_PAD, _W_EMB:_W_EMB + D],
                   preferred_element_type=f32) + vec(_V_BEMB))
    x = jnp.tanh(emb)                                                 # (16, 64)

    # --- pre-LN multi-head self-attention (use_residual=False) --------------
    n1 = _layernorm(x, vec(_V_LN1G), vec(_V_LN1B))

    qkv = jnp.dot(n1, w_ref[:, _W_QKV:_W_QKV + 3 * D],
                  preferred_element_type=f32)                         # (16, 192)
    q = qkv[:, 0:D] + vec(_V_BQ)
    k = qkv[:, D:2 * D] + vec(_V_BK)
    v = qkv[:, 2 * D:3 * D] + vec(_V_BV)

    # block-diagonal key / value expansion via static head masks.
    k_bd = (jnp.concatenate([k.T] * H, axis=1)
            * c_ref[_C_KMASK:_C_KMASK + D, :])                        # (64, 128)
    v_bd = (jnp.concatenate([v] * H, axis=0)
            * c_ref[_C_VMASK:_C_VMASK + HB, 0:D])                     # (128, 64)

    scores = (jnp.dot(q, k_bd, preferred_element_type=f32)
              * (1.0 / math.sqrt(HD)))
    scores = scores + c_ref[_C_SMASK:_C_SMASK + BS, :]                # (16, 128)

    # per-(head, pixel) softmax over 16-lane groups; the global row max cancels
    # within each group so it is a valid stability offset; exact divide.
    m = jnp.max(scores, axis=-1, keepdims=True)
    p = jnp.exp(scores - m)
    denom = jnp.dot(p, c_ref[_C_G:_C_G + HB, :],
                    preferred_element_type=f32)                       # group sums
    p = p / denom
    ctx = jnp.dot(p, v_bd, preferred_element_type=f32)                # (16, 64)

    # single (16,64)@(64,64) output projection (concat-head layout preserved).
    attn = (jnp.dot(ctx, w_ref[:, _W_O:_W_O + D], preferred_element_type=f32)
            + vec(_V_BO))                                             # (16, 64)

    # --- pre-LN feed-forward (use_residual=False) ----------------------------
    n2 = _layernorm(attn, vec(_V_LN2G), vec(_V_LN2B))
    h1 = (jnp.dot(n2, w_ref[:, _W_1:_W_1 + DFF], preferred_element_type=f32)
          + vec(_V_B1))
    h1 = _gelu_exact(h1)
    h2 = (jnp.dot(h1, w_ref[:, _W_2:_W_2 + D], preferred_element_type=f32)
          + vec(_V_B2))                                               # (16, 64)

    # --- per-pixel max aggregation over the band (sequence) dim --------------
    agg = jnp.concatenate(
        [jnp.max(h2[pix * S:(pix + 1) * S, :], axis=0, keepdims=True)
         for pix in range(PIX)],
        axis=0)                                                       # (2, 64)

    # --- head (Linear D -> 4, padded to 64 lanes) + DER transforms -----------
    logits = (jnp.dot(agg, w_ref[:, _W_H:_W_H + D], preferred_element_type=f32)
              + vec(_V_BH, PIX))                                      # (2, 64)
    sp = _softplus(logits)
    lane = lax.broadcasted_iota(jnp.int32, logits.shape, 1)
    der = jnp.where(lane == 0, logits, jnp.where(lane == 2, sp + 1.0, sp))

    # lane-dense (8, 128) output block: pixel outputs in rows 0:PIX, lanes 0:4.
    out_block = jnp.concatenate([der, jnp.zeros((PIX, LANES - D), f32)], axis=1)
    out_block = jnp.concatenate(
        [out_block, jnp.zeros((OUT_ROWS - PIX, LANES), f32)], axis=0)
    o_ref[...] = out_block


# --------------------------- host-side packing ------------------------------
def _build_static_masks():
    col = np.arange(HB)
    grp = col // BS                        # head index of each key column
    keyrow = col % BS                      # key row within the tile
    feat_head = np.arange(D) // HD         # head index of each feature lane

    g = (grp[:, None] == grp[None, :]).astype(np.float32)             # (128, 128)
    kmask = (feat_head[:, None] == grp[None, :]).astype(np.float32)   # (64, 128)
    vmask = (grp[:, None] == feat_head[None, :]).astype(np.float32)   # (128, 64)

    qpix = np.arange(BS) // S
    kpix = keyrow // S
    smask = np.where(qpix[:, None] == kpix[None, :],
                     0.0, -1e30).astype(np.float32)                   # (16, 128)
    return g, kmask, vmask, smask


_STATIC_MASKS = _build_static_masks()


def _pack_feat(x, banddef):
    """x: (n, S, 1) -> (n*S, FEAT_PAD) [spectra | normalized band | zeros]."""
    n = x.shape[0]
    spec = x[..., 0].astype(jnp.float32).reshape(n * S, 1)
    band = ((banddef.astype(jnp.float32) - BAND_MEAN) / BAND_STD).reshape(1, S)
    band = jnp.broadcast_to(band, (n, S)).reshape(n * S, 1)
    zeros = jnp.zeros((n * S, FEAT_PAD - 2), jnp.float32)
    return jnp.concatenate([spec, band, zeros], axis=1)


def _pack_consts(params):
    g, kmask, vmask, smask = _STATIC_MASKS

    def vec_block(row):                     # row: (1, D) -> (BS, 128)
        blk = jnp.broadcast_to(row, (BS, D))
        return jnp.pad(blk, ((0, 0), (0, LANES - D)))

    vec_rows = [
        params["b_emb"], params["ln1_g"], params["ln1_b"],
        params["bq"], params["bk"], params["bv"], params["bo"],
        params["ln2_g"], params["ln2_b"], params["b1"], params["b2"],
        jnp.pad(params["bh"], ((0, 0), (0, D - DOUT))),
    ]
    blocks = [
        jnp.asarray(g),                                            # rows   0:128
        jnp.asarray(smask),                                        # rows 128:144
        jnp.asarray(kmask),                                        # rows 144:208
        jnp.pad(jnp.asarray(vmask), ((0, 0), (0, LANES - D))),     # rows 208:336
    ]
    blocks += [vec_block(r) for r in vec_rows]                     # rows 336:528
    consts = jnp.concatenate(blocks, axis=0)
    assert consts.shape == (C_ROWS, LANES)
    return consts


def _pack_weights(params):
    wqkv = jnp.concatenate([params["wq"], params["wk"], params["wv"]], axis=1)
    wh_pad = jnp.pad(params["wh"], ((0, 0), (0, D - DOUT)))            # (64, 64)
    wemb_col = jnp.pad(params["w_emb"], ((0, D - 2), (0, 0)))          # (64, 64)
    slab = jnp.concatenate(
        [wqkv, params["wo"], params["w1"], params["w2"], wh_pad, wemb_col],
        axis=1)
    assert slab.shape == (D, W_COLS)
    return slab


# ------------------------------- wrapper -------------------------------------
def spectf_der_forward(x, banddef, params):
    """x: (n, S, 1) float32, banddef: (S,) float32. Returns (n, DOUT)."""
    npix = x.shape[0]
    npad = (-npix) % PIX
    if npad:
        x = jnp.concatenate([x, jnp.zeros((npad,) + x.shape[1:], x.dtype)],
                            axis=0)
    ntiles = (npix + npad) // PIX

    feat = _pack_feat(x, banddef)
    consts = _pack_consts(params)
    weights = _pack_weights(params)

    cost = pl.CostEstimate(
        flops=1_900_000 * ntiles,
        transcendentals=4_500 * ntiles,
        bytes_accessed=400_000 + 6_000 * ntiles,
    )

    out = pl.pallas_call(
        spectf_der_kernel,
        out_shape=jax.ShapeDtypeStruct((ntiles * OUT_ROWS, LANES), jnp.float32),
        grid_spec=pltpu.PrefetchScalarGridSpec(
            num_scalar_prefetch=0,
            grid=(ntiles,),
            in_specs=[
                pl.BlockSpec((BS, FEAT_PAD), lambda i: (i, 0)),     # per-step rows
                pl.BlockSpec((C_ROWS, LANES), lambda i: (0, 0)),    # resident
                pl.BlockSpec((D, W_COLS), lambda i: (0, 0)),        # resident
            ],
            out_specs=pl.BlockSpec((OUT_ROWS, LANES), lambda i: (i, 0)),
        ),
        compiler_params=pltpu.CompilerParams(
            dimension_semantics=("parallel",)),
        cost_estimate=cost,
    )(feat, consts, weights)

    der = out.reshape(ntiles, OUT_ROWS, LANES)[:, :PIX, :DOUT]
    der = der.reshape(ntiles * PIX, DOUT)
    return der[:npix]


# -------------------------------- params -------------------------------------
def _xavier_uniform(key, shape_out_in):
    fan_out, fan_in = shape_out_in
    bound = math.sqrt(6.0 / (fan_in + fan_out))
    # stored transposed so kernels compute x @ W directly: shape (fan_in, fan_out)
    return jax.random.uniform(key, (fan_in, fan_out), jnp.float32, -bound, bound)


def init_params(key):
    # Note: q/k/v are initialized per-matrix (PyTorch MHA uses one fused
    # in_proj weight); irrelevant when loading real weights.
    ks = jax.random.split(key, 12)
    p = {}
    # SpectralEmbed: Linear(2 -> D)
    p["w_emb"] = _xavier_uniform(ks[0], (D, 2))            # (2, D)
    p["b_emb"] = jnp.zeros((1, D), jnp.float32)
    # LayerNorms
    p["ln1_g"] = jnp.ones((1, D), jnp.float32)
    p["ln1_b"] = jnp.zeros((1, D), jnp.float32)
    p["ln2_g"] = jnp.ones((1, D), jnp.float32)
    p["ln2_b"] = jnp.zeros((1, D), jnp.float32)
    # MultiheadAttention: q/k/v projections + out_proj
    p["wq"] = _xavier_uniform(ks[1], (D, D))
    p["wk"] = _xavier_uniform(ks[2], (D, D))
    p["wv"] = _xavier_uniform(ks[3], (D, D))
    p["bq"] = jnp.zeros((1, D), jnp.float32)
    p["bk"] = jnp.zeros((1, D), jnp.float32)
    p["bv"] = jnp.zeros((1, D), jnp.float32)
    p["wo"] = _xavier_uniform(ks[4], (D, D))
    p["bo"] = jnp.zeros((1, D), jnp.float32)
    # FeedForward: Linear(D -> DFF), Linear(DFF -> D)
    p["w1"] = _xavier_uniform(ks[5], (DFF, D))
    p["b1"] = jnp.zeros((1, DFF), jnp.float32)
    p["w2"] = _xavier_uniform(ks[6], (D, DFF))
    p["b2"] = jnp.zeros((1, D), jnp.float32)
    # Head: Linear(D -> 4)
    p["wh"] = _xavier_uniform(ks[7], (DOUT, D))
    p["bh"] = jnp.zeros((1, DOUT), jnp.float32)
    return p


if __name__ == "__main__":
    key = jax.random.PRNGKey(0)
    k_in, k_par = jax.random.split(key)

    # band center wavelengths (EMIT-like range), S bands
    banddef = jnp.linspace(400.0, 2500.0, S).astype(jnp.float32)
    # input spectra (b, s, 1)
    x = jax.random.uniform(k_in, (NPIX_DEMO, S, 1), jnp.float32, 0.0, 1.0)

    params = init_params(k_par)

    fwd = jax.jit(spectf_der_forward)
    out = jax.block_until_ready(fwd(x, banddef, params))
    assert out.shape == (NPIX_DEMO, DOUT), out.shape
    assert bool(jnp.all(jnp.isfinite(out))), "non-finite output"
    print("KERNEL_OK")
</pallas_src>

<mosaic_0001>
module attributes {stable_mosaic.version = 11 : i64} {
  func.func @spectf_der_kernel(%arg0: i32, %arg1: memref<16x8xf32, #tpu.memory_space<vmem>>, %arg2: memref<528x128xf32, #tpu.memory_space<vmem>>, %arg3: memref<64x512xf32, #tpu.memory_space<vmem>>, %arg4: memref<8x128xf32, #tpu.memory_space<vmem>>) attributes {dimension_semantics = [#tpu.dimension_semantics<parallel>], iteration_bounds = array<i64: 1>, scalar_prefetch = 0 : i64, scratch_operands = 0 : i64, tpu.core_type = #tpu.core_type<tc>, window_params = [{transform_indices = @transform_0, window_bounds = array<i64: 16, 8>}, {pipeline_mode = #tpu.pipeline_mode<synchronous>, transform_indices = @transform_1, window_bounds = array<i64: 528, 128>}, {pipeline_mode = #tpu.pipeline_mode<synchronous>, transform_indices = @transform_2, window_bounds = array<i64: 64, 512>}, {transform_indices = @transform_3, window_bounds = array<i64: 8, 128>}]} {
    %c0 = arith.constant 0 : index
    %c0_0 = arith.constant 0 : index
    %0 = vector.load %arg1[%c0, %c0_0] : memref<16x8xf32, #tpu.memory_space<vmem>>, vector<16x8xf32>
    %c0_1 = arith.constant 0 : index
    %c448 = arith.constant 448 : index
    %1 = vector.load %arg3[%c0_1, %c448] : memref<64x512xf32, #tpu.memory_space<vmem>>, vector<8x64xf32>
    %cst = arith.constant dense<0.000000e+00> : vector<16x64xf32>
    %2 = tpu.matmul %0, %1, %cst {dimension_numbers = #tpu.dot_dimension_numbers<[1], [0], [0], [1], [0, 0, 1, 1], [], []>} : vector<16x8xf32>, vector<8x64xf32>, vector<16x64xf32> -> vector<16x64xf32>
    %c336 = arith.constant 336 : index
    %c0_2 = arith.constant 0 : index
    %3 = vector.load %arg2[%c336, %c0_2] : memref<528x128xf32, #tpu.memory_space<vmem>>, vector<16x64xf32>
    %4 = arith.addf %2, %3 : vector<16x64xf32>
    %5 = math.tanh %4 : vector<16x64xf32>
    %c352 = arith.constant 352 : index
    %c0_3 = arith.constant 0 : index
    %6 = vector.load %arg2[%c352, %c0_3] : memref<528x128xf32, #tpu.memory_space<vmem>>, vector<16x64xf32>
    %c368 = arith.constant 368 : index
    %c0_4 = arith.constant 0 : index
    %7 = vector.load %arg2[%c368, %c0_4] : memref<528x128xf32, #tpu.memory_space<vmem>>, vector<16x64xf32>
    %cst_5 = arith.constant dense<0.000000e+00> : vector<16xf32>
    %8 = vector.multi_reduction <add>, %5, %cst_5 [1] : vector<16x64xf32> to vector<16xf32>
    %9 = vector.shape_cast %8 : vector<16xf32> to vector<16x1xf32>
    %cst_6 = arith.constant 6.400000e+01 : f32
    %10 = vector.broadcast %cst_6 : f32 to vector<16x1xf32>
    %11 = arith.divf %9, %10 : vector<16x1xf32>
    %12 = vector.broadcast %11 : vector<16x1xf32> to vector<16x64xf32>
    %13 = arith.subf %5, %12 : vector<16x64xf32>
    %14 = arith.mulf %13, %13 : vector<16x64xf32>
    %cst_7 = arith.constant dense<0.000000e+00> : vector<16xf32>
    %15 = vector.multi_reduction <add>, %14, %cst_7 [1] : vector<16x64xf32> to vector<16xf32>
    %16 = vector.shape_cast %15 : vector<16xf32> to vector<16x1xf32>
    %cst_8 = arith.constant 6.400000e+01 : f32
    %17 = vector.broadcast %cst_8 : f32 to vector<16x1xf32>
    %18 = arith.divf %16, %17 : vector<16x1xf32>
    %19 = vector.broadcast %11 : vector<16x1xf32> to vector<16x64xf32>
    %20 = arith.subf %5, %19 : vector<16x64xf32>
    %cst_9 = arith.constant 9.99999974E-6 : f32
    %21 = vector.broadcast %cst_9 : f32 to vector<16x1xf32>
    %22 = arith.addf %18, %21 : vector<16x1xf32>
    %23 = math.rsqrt %22 : vector<16x1xf32>
    %24 = vector.broadcast %23 : vector<16x1xf32> to vector<16x64xf32>
    %25 = arith.mulf %20, %24 : vector<16x64xf32>
    %26 = arith.mulf %25, %6 : vector<16x64xf32>
    %27 = arith.addf %26, %7 : vector<16x64xf32>
    %c0_10 = arith.constant 0 : index
    %c0_11 = arith.constant 0 : index
    %28 = vector.load %arg3[%c0_10, %c0_11] : memref<64x512xf32, #tpu.memory_space<vmem>>, vector<64x192xf32>
    %cst_12 = arith.constant dense<0.000000e+00> : vector<16x192xf32>
    %29 = tpu.matmul %27, %28, %cst_12 {dimension_numbers = #tpu.dot_dimension_numbers<[1], [0], [0], [1], [0, 0, 1, 1], [], []>} : vector<16x64xf32>, vector<64x192xf32>, vector<16x192xf32> -> vector<16x192xf32>
    %30 = vector.extract_strided_slice %29 {offsets = [0, 0], sizes = [16, 64], strides = [1, 1]} : vector<16x192xf32> to vector<16x64xf32>
    %c384 = arith.constant 384 : index
    %c0_13 = arith.constant 0 : index
    %31 = vector.load %arg2[%c384, %c0_13] : memref<528x128xf32, #tpu.memory_space<vmem>>, vector<16x64xf32>
    %32 = arith.addf %30, %31 : vector<16x64xf32>
    %33 = vector.extract_strided_slice %29 {offsets = [0, 64], sizes = [16, 64], strides = [1, 1]} : vector<16x192xf32> to vector<16x64xf32>
    %c400 = arith.constant 400 : index
    %c0_14 = arith.constant 0 : index
    %34 = vector.load %arg2[%c400, %c0_14] : memref<528x128xf32, #tpu.memory_space<vmem>>, vector<16x64xf32>
    %35 = arith.addf %33, %34 : vector<16x64xf32>
    %36 = vector.extract_strided_slice %29 {offsets = [0, 128], sizes = [16, 64], strides = [1, 1]} : vector<16x192xf32> to vector<16x64xf32>
    %c416 = arith.constant 416 : index
    %c0_15 = arith.constant 0 : index
    %37 = vector.load %arg2[%c416, %c0_15] : memref<528x128xf32, #tpu.memory_space<vmem>>, vector<16x64xf32>
    %38 = arith.addf %36, %37 : vector<16x64xf32>
    %39 = tpu.transpose %35, [1, 0] : vector<16x64xf32> -> vector<64x16xf32>
    %40 = tpu.concatenate %39, %39, %39, %39, %39, %39, %39, %39 in 1 : vector<64x16xf32>, vector<64x16xf32>, vector<64x16xf32>, vector<64x16xf32>, vector<64x16xf32>, vector<64x16xf32>, vector<64x16xf32>, vector<64x16xf32> -> vector<64x128xf32>
    %c144 = arith.constant 144 : index
    %c0_16 = arith.constant 0 : index
    %41 = vector.load %arg2[%c144, %c0_16] : memref<528x128xf32, #tpu.memory_space<vmem>>, vector<64x128xf32>
    %42 = arith.mulf %40, %41 : vector<64x128xf32>
    %43 = tpu.concatenate %38, %38, %38, %38, %38, %38, %38, %38 in 0 : vector<16x64xf32>, vector<16x64xf32>, vector<16x64xf32>, vector<16x64xf32>, vector<16x64xf32>, vector<16x64xf32>, vector<16x64xf32>, vector<16x64xf32> -> vector<128x64xf32>
    %c208 = arith.constant 208 : index
    %c0_17 = arith.constant 0 : index
    %44 = vector.load %arg2[%c208, %c0_17] : memref<528x128xf32, #tpu.memory_space<vmem>>, vector<128x64xf32>
    %45 = arith.mulf %43, %44 : vector<128x64xf32>
    %cst_18 = arith.constant dense<0.000000e+00> : vector<16x128xf32>
    %46 = tpu.matmul %32, %42, %cst_18 {dimension_numbers = #tpu.dot_dimension_numbers<[1], [0], [0], [1], [0, 0, 1, 1], [], []>} : vector<16x64xf32>, vector<64x128xf32>, vector<16x128xf32> -> vector<16x128xf32>
    %cst_19 = arith.constant 0.353553385 : f32
    %47 = vector.broadcast %cst_19 : f32 to vector<16x128xf32>
    %48 = arith.mulf %46, %47 : vector<16x128xf32>
    %c128 = arith.constant 128 : index
    %c0_20 = arith.constant 0 : index
    %49 = vector.load %arg2[%c128, %c0_20] : memref<528x128xf32, #tpu.memory_space<vmem>>, vector<16x128xf32>
    %50 = arith.addf %48, %49 : vector<16x128xf32>
    %cst_21 = arith.constant dense<0xFF800000> : vector<16xf32>
    %51 = vector.multi_reduction <maximumf>, %50, %cst_21 [1] : vector<16x128xf32> to vector<16xf32>
    %52 = vector.shape_cast %51 : vector<16xf32> to vector<16x1xf32>
    %53 = vector.broadcast %52 : vector<16x1xf32> to vector<16x128xf32>
    %54 = arith.subf %50, %53 : vector<16x128xf32>
    %55 = math.exp %54 : vector<16x128xf32>
    %c0_22 = arith.constant 0 : index
    %c0_23 = arith.constant 0 : index
    %56 = vector.load %arg2[%c0_22, %c0_23] : memref<528x128xf32, #tpu.memory_space<vmem>>, vector<128x128xf32>
    %cst_24 = arith.constant dense<0.000000e+00> : vector<16x128xf32>
    %57 = tpu.matmul %55, %56, %cst_24 {dimension_numbers = #tpu.dot_dimension_numbers<[1], [0], [0], [1], [0, 0, 1, 1], [], []>} : vector<16x128xf32>, vector<128x128xf32>, vector<16x128xf32> -> vector<16x128xf32>
    %58 = arith.divf %55, %57 : vector<16x128xf32>
    %cst_25 = arith.constant dense<0.000000e+00> : vector<16x64xf32>
    %59 = tpu.matmul %58, %45, %cst_25 {dimension_numbers = #tpu.dot_dimension_numbers<[1], [0], [0], [1], [0, 0, 1, 1], [], []>} : vector<16x128xf32>, vector<128x64xf32>, vector<16x64xf32> -> vector<16x64xf32>
    %c0_26 = arith.constant 0 : index
    %c192 = arith.constant 192 : index
    %60 = vector.load %arg3[%c0_26, %c192] : memref<64x512xf32, #tpu.memory_space<vmem>>, vector<64x64xf32>
    %cst_27 = arith.constant dense<0.000000e+00> : vector<16x64xf32>
    %61 = tpu.matmul %59, %60, %cst_27 {dimension_numbers = #tpu.dot_dimension_numbers<[1], [0], [0], [1], [0, 0, 1, 1], [], []>} : vector<16x64xf32>, vector<64x64xf32>, vector<16x64xf32> -> vector<16x64xf32>
    %c432 = arith.constant 432 : index
    %c0_28 = arith.constant 0 : index
    %62 = vector.load %arg2[%c432, %c0_28] : memref<528x128xf32, #tpu.memory_space<vmem>>, vector<16x64xf32>
    %63 = arith.addf %61, %62 : vector<16x64xf32>
    %c448_29 = arith.constant 448 : index
    %c0_30 = arith.constant 0 : index
    %64 = vector.load %arg2[%c448_29, %c0_30] : memref<528x128xf32, #tpu.memory_space<vmem>>, vector<16x64xf32>
    %c464 = arith.constant 464 : index
    %c0_31 = arith.constant 0 : index
    %65 = vector.load %arg2[%c464, %c0_31] : memref<528x128xf32, #tpu.memory_space<vmem>>, vector<16x64xf32>
    %cst_32 = arith.constant dense<0.000000e+00> : vector<16xf32>
    %66 = vector.multi_reduction <add>, %63, %cst_32 [1] : vector<16x64xf32> to vector<16xf32>
    %67 = vector.shape_cast %66 : vector<16xf32> to vector<16x1xf32>
    %cst_33 = arith.constant 6.400000e+01 : f32
    %68 = vector.broadcast %cst_33 : f32 to vector<16x1xf32>
    %69 = arith.divf %67, %68 : vector<16x1xf32>
    %70 = vector.broadcast %69 : vector<16x1xf32> to vector<16x64xf32>
    %71 = arith.subf %63, %70 : vector<16x64xf32>
    %72 = arith.mulf %71, %71 : vector<16x64xf32>
    %cst_34 = arith.constant dense<0.000000e+00> : vector<16xf32>
    %73 = vector.multi_reduction <add>, %72, %cst_34 [1] : vector<16x64xf32> to vector<16xf32>
    %74 = vector.shape_cast %73 : vector<16xf32> to vector<16x1xf32>
    %cst_35 = arith.constant 6.400000e+01 : f32
    %75 = vector.broadcast %cst_35 : f32 to vector<16x1xf32>
    %76 = arith.divf %74, %75 : vector<16x1xf32>
    %77 = vector.broadcast %69 : vector<16x1xf32> to vector<16x64xf32>
    %78 = arith.subf %63, %77 : vector<16x64xf32>
    %cst_36 = arith.constant 9.99999974E-6 : f32
    %79 = vector.broadcast %cst_36 : f32 to vector<16x1xf32>
    %80 = arith.addf %76, %79 : vector<16x1xf32>
    %81 = math.rsqrt %80 : vector<16x1xf32>
    %82 = vector.broadcast %81 : vector<16x1xf32> to vector<16x64xf32>
    %83 = arith.mulf %78, %82 : vector<16x64xf32>
    %84 = arith.mulf %83, %64 : vector<16x64xf32>
    %85 = arith.addf %84, %65 : vector<16x64xf32>
    %c0_37 = arith.constant 0 : index
    %c256 = arith.constant 256 : index
    %86 = vector.load %arg3[%c0_37, %c256] : memref<64x512xf32, #tpu.memory_space<vmem>>, vector<64x64xf32>
    %cst_38 = arith.constant dense<0.000000e+00> : vector<16x64xf32>
    %87 = tpu.matmul %85, %86, %cst_38 {dimension_numbers = #tpu.dot_dimension_numbers<[1], [0], [0], [1], [0, 0, 1, 1], [], []>} : vector<16x64xf32>, vector<64x64xf32>, vector<16x64xf32> -> vector<16x64xf32>
    %c480 = arith.constant 480 : index
    %c0_39 = arith.constant 0 : index
    %88 = vector.load %arg2[%c480, %c0_39] : memref<528x128xf32, #tpu.memory_space<vmem>>, vector<16x64xf32>
    %89 = arith.addf %87, %88 : vector<16x64xf32>
    %cst_40 = arith.constant 5.000000e-01 : f32
    %90 = vector.broadcast %cst_40 : f32 to vector<16x64xf32>
    %91 = arith.mulf %90, %89 : vector<16x64xf32>
    %cst_41 = arith.constant 0.707106769 : f32
    %92 = vector.broadcast %cst_41 : f32 to vector<16x64xf32>
    %93 = arith.mulf %89, %92 : vector<16x64xf32>
    %94 = math.erf %93 : vector<16x64xf32>
    %cst_42 = arith.constant 1.000000e+00 : f32
    %95 = vector.broadcast %cst_42 : f32 to vector<16x64xf32>
    %96 = arith.addf %95, %94 : vector<16x64xf32>
    %97 = arith.mulf %91, %96 : vector<16x64xf32>
    %c0_43 = arith.constant 0 : index
    %c320 = arith.constant 320 : index
    %98 = vector.load %arg3[%c0_43, %c320] : memref<64x512xf32, #tpu.memory_space<vmem>>, vector<64x64xf32>
    %cst_44 = arith.constant dense<0.000000e+00> : vector<16x64xf32>
    %99 = tpu.matmul %97, %98, %cst_44 {dimension_numbers = #tpu.dot_dimension_numbers<[1], [0], [0], [1], [0, 0, 1, 1], [], []>} : vector<16x64xf32>, vector<64x64xf32>, vector<16x64xf32> -> vector<16x64xf32>
    %c496 = arith.constant 496 : index
    %c0_45 = arith.constant 0 : index
    %100 = vector.load %arg2[%c496, %c0_45] : memref<528x128xf32, #tpu.memory_space<vmem>>, vector<16x64xf32>
    %101 = arith.addf %99, %100 : vector<16x64xf32>
    %102 = vector.extract_strided_slice %101 {offsets = [0, 0], sizes = [8, 64], strides = [1, 1]} : vector<16x64xf32> to vector<8x64xf32>
    %cst_46 = arith.constant dense<0xFF800000> : vector<64xf32>
    %103 = vector.multi_reduction <maximumf>, %102, %cst_46 [0] : vector<8x64xf32> to vector<64xf32>
    %104 = vector.shape_cast %103 : vector<64xf32> to vector<1x64xf32>
    %105 = vector.extract_strided_slice %101 {offsets = [8, 0], sizes = [8, 64], strides = [1, 1]} : vector<16x64xf32> to vector<8x64xf32>
    %cst_47 = arith.constant dense<0xFF800000> : vector<64xf32>
    %106 = vector.multi_reduction <maximumf>, %105, %cst_47 [0] : vector<8x64xf32> to vector<64xf32>
    %107 = vector.shape_cast %106 : vector<64xf32> to vector<1x64xf32>
    %108 = tpu.concatenate %104, %107 in 0 : vector<1x64xf32>, vector<1x64xf32> -> vector<2x64xf32>
    %c0_48 = arith.constant 0 : index
    %c384_49 = arith.constant 384 : index
    %109 = vector.load %arg3[%c0_48, %c384_49] : memref<64x512xf32, #tpu.memory_space<vmem>>, vector<64x64xf32>
    %cst_50 = arith.constant dense<0.000000e+00> : vector<2x64xf32>
    %110 = tpu.matmul %108, %109, %cst_50 {dimension_numbers = #tpu.dot_dimension_numbers<[1], [0], [0], [1], [0, 0, 1, 1], [], []>} : vector<2x64xf32>, vector<64x64xf32>, vector<2x64xf32> -> vector<2x64xf32>
    %c512 = arith.constant 512 : index
    %c0_51 = arith.constant 0 : index
    %111 = vector.load %arg2[%c512, %c0_51] : memref<528x128xf32, #tpu.memory_space<vmem>>, vector<2x64xf32>
    %112 = arith.addf %110, %111 : vector<2x64xf32>
    %cst_52 = arith.constant 0.000000e+00 : f32
    %113 = vector.broadcast %cst_52 : f32 to vector<2x64xf32>
    %114 = arith.maximumf %112, %113 : vector<2x64xf32>
    %115 = math.absf %112 : vector<2x64xf32>
    %cst_53 = arith.constant 0.000000e+00 : f32
    %116 = vector.broadcast %cst_53 : f32 to vector<2x64xf32>
    %117 = arith.subf %116, %115 : vector<2x64xf32>
    %118 = math.exp %117 : vector<2x64xf32>
    %119 = math.log1p %118 : vector<2x64xf32>
    %120 = arith.addf %114, %119 : vector<2x64xf32>
    %121 = tpu.iota {dimensions = array<i32: 1>} : vector<2x64xi32>
    %c0_i32 = arith.constant 0 : i32
    %122 = vector.broadcast %c0_i32 : i32 to vector<2x64xi32>
    %123 = arith.cmpi eq, %121, %122 : vector<2x64xi32>
    %c2_i32 = arith.constant 2 : i32
    %124 = vector.broadcast %c2_i32 : i32 to vector<2x64xi32>
    %125 = arith.cmpi eq, %121, %124 : vector<2x64xi32>
    %cst_54 = arith.constant 1.000000e+00 : f32
    %126 = vector.broadcast %cst_54 : f32 to vector<2x64xf32>
    %127 = arith.addf %120, %126 : vector<2x64xf32>
    %128 = arith.select %125, %127, %120 : vector<2x64xi1>, vector<2x64xf32>
    %129 = arith.select %123, %112, %128 : vector<2x64xi1>, vector<2x64xf32>
    %cst_55 = arith.constant 0.000000e+00 : f32
    %130 = vector.broadcast %cst_55 : f32 to vector<2x64xf32>
    %131 = tpu.concatenate %129, %130 in 1 : vector<2x64xf32>, vector<2x64xf32> -> vector<2x128xf32>
    %cst_56 = arith.constant 0.000000e+00 : f32
    %132 = vector.broadcast %cst_56 : f32 to vector<6x128xf32>
    %133 = tpu.concatenate %131, %132 in 0 : vector<2x128xf32>, vector<6x128xf32> -> vector<8x128xf32>
    %c0_57 = arith.constant 0 : index
    %c0_58 = arith.constant 0 : index
    %134 = vector.load %arg4[%c0_57, %c0_58] : memref<8x128xf32, #tpu.memory_space<vmem>>, vector<8x128xf32>
    tpu.vector_store %arg4[%c0_57, %c0_58], %133 {strides = array<i32>} : memref<8x128xf32, #tpu.memory_space<vmem>>, vector<8x128xf32>,
    return
  }
  func.func @transform_0(%arg0: i32) -> (i32, i32) {
    %c0_i32 = arith.constant 0 : i32
    %c0_i32_0 = arith.constant 0 : i32
    return %arg0, %c0_i32 : i32, i32
  }
  func.func @transform_1(%arg0: i32) -> (i32, i32) {
    %c0_i32 = arith.constant 0 : i32
    %c0_i32_0 = arith.constant 0 : i32
    %c0_i32_1 = arith.constant 0 : i32
    return %c0_i32, %c0_i32_0 : i32, i32
  }
  func.func @transform_2(%arg0: i32) -> (i32, i32) {
    %c0_i32 = arith.constant 0 : i32
    %c0_i32_0 = arith.constant 0 : i32
    %c0_i32_1 = arith.constant 0 : i32
    return %c0_i32, %c0_i32_0 : i32, i32
  }
  func.func @transform_3(%arg0: i32) -> (i32, i32) {
    %c0_i32 = arith.constant 0 : i32
    %c0_i32_0 = arith.constant 0 : i32
    return %arg0, %c0_i32 : i32, i32
  }
}

</mosaic_0001>

<llo_original>
// kernel: spectf_der_forward.1
$region0: #{spectf_der_forward.1}
  #allocation0 [shape = 'u32[]', space=smem, size = 0x4, offset = 0x4, fixed_abs, tag = 'smem constant byte address 0x4 - core index']
  #allocation1 [shape = 'u32[144,128]{1,0:T(1,128)}', space=vmem, size = 0x12000, scoped, tag = 'internal scratch']
  %s0 = inlined_call_operand.vmem [shape: f32[16,8], index: 0, kind: input, shape index: {}]
  %s1 = inlined_call_operand.vmem [shape: f32[528,128], index: 1, kind: input, shape index: {}]
  %s2 = inlined_call_operand.vmem [shape: f32[64,512], index: 2, kind: input, shape index: {}]
  %s3 = inlined_call_operand.vmem [shape: f32[8,128], index: 3, kind: output, shape index: {}]
  %s4 = sld [smem:[#allocation0]]
  $region22: #{spectf_der_forward.1} parent=0
    _
  %s6 = ssub.s32 1, %s4
  %s7 = scalar_select 0, %s6, %s4
  // Predicated region
  $region2: #{spectf_der_forward.1} parent=0 // pred_check
    _
  $region3: #{spectf_der_forward.1} parent=0 // pred_check_branch
    %9 = sbr.rel (0) target = $region5
  $region4: #{spectf_der_forward.1} parent=0 // pred_region
    _
  $region5: #{spectf_der_forward.1} parent=0 // pred_fallthru
    _
  // Predicated region
  $region6: #{spectf_der_forward.1} parent=0 // pred_check
    _
  $region7: #{spectf_der_forward.1} parent=0 // pred_check_branch
    %11 = sbr.rel (0) target = $region9
  $region8: #{spectf_der_forward.1} parent=0 // pred_region
    _
  $region9: #{spectf_der_forward.1} parent=0 // pred_fallthru
    _
  // Predicated region
  $region10: #{spectf_der_forward.1} parent=0 // pred_check
    _
  $region11: #{spectf_der_forward.1} parent=0 // pred_check_branch
    %13 = sbr.rel (0) target = $region13
  $region12: #{spectf_der_forward.1} parent=0 // pred_region
    _
  $region13: #{spectf_der_forward.1} parent=0 // pred_fallthru
    _
  %v14 = vld [vmem:[%s0] sm:$0xff]
  %v15 = vld [vmem:[%s0 + $0x8] sm:$0xff]
  %v16 = vld [vmem:[%s2 + $0x18] sm:$0xff]
  %v17 = vld [vmem:[%s1 + $0x150] sm:$0xff]
  %v18 = vld [vmem:[%s1 + $0x158] sm:$0xff]
  %20 = vrot.lane.b32.xlu0 %v16, 64
  %v21 = vpop.permute.xlu0 %20
  %vm23 = vcmask 64512
  %v25 = vsel %vm23, %v14, 0
  %v28 = vsel %vm23, %v15, 0
  %30 = vmatprep.subr.mxu0 0.0
  %31 = vmatpush1.msra.mxu0 %v21
  %32 = vmatprep.subr.mxu0 0.0
  %33 = vmatpush1.msra.mxu0 0.0
  %34 = vmatprep.subr.mxu0 0.0
  %35 = vmatpush1.msra.mxu0 0.0
  %36 = vmatprep.subr.mxu0 0.0
  %37 = vmatpush1.msra.mxu0 0.0
  %38 = vmatprep.subr.mxu0 0.0
  %39 = vmatpush1.msra.mxu0 0.0
  %40 = vmatprep.subr.mxu0 0.0
  %41 = vmatpush1.msra.mxu0 0.0
  %42 = vmatprep.subr.mxu0 0.0
  %43 = vmatpush1.msra.mxu0 0.0
  %44 = vmatprep.subr.mxu0 0.0
  %45 = vmatpush1.msra.mxu0 0.0
  %46 = vmatprep.subr.mxu0 0.0
  %47 = vmatpush1.msra.mxu0 0.0
  %48 = vmatprep.subr.mxu0 0.0
  %49 = vmatpush1.msra.mxu0 0.0
  %50 = vmatprep.subr.mxu0 0.0
  %51 = vmatpush1.msra.mxu0 0.0
  %52 = vmatprep.subr.mxu0 0.0
  %53 = vmatpush1.msra.mxu0 0.0
  %54 = vmatprep.subr.mxu0 0.0
  %55 = vmatpush1.msra.mxu0 0.0
  %56 = vmatprep.subr.mxu0 0.0
  %57 = vmatpush1.msra.mxu0 0.0
  %58 = vmatprep.subr.mxu0 0.0
  %59 = vmatpush1.msra.mxu0 0.0
  %60 = vmatprep.subr.mxu0 0.0
  %61 = vmatpush1.msra.mxu0 0.0
  %62 = vmatprep.subr.mxu0 0.0
  %63 = vmatpush1.msra.mxu0 0.0
  %64 = vmatprep.subr.mxu0 0.0
  %65 = vmatpush1.msra.mxu0 0.0
  %66 = vmatprep.subr.mxu0 0.0
  %67 = vmatpush1.msra.mxu0 0.0
  %68 = vmatprep.subr.mxu0 0.0
  %69 = vmatpush1.msra.mxu0 0.0
  %70 = vmatprep.subr.mxu0 0.0
  %71 = vmatpush1.msra.mxu0 0.0
  %72 = vmatprep.subr.mxu0 0.0
  %73 = vmatpush1.msra.mxu0 0.0
  %74 = vmatprep.subr.mxu0 0.0
  %75 = vmatpush1.msra.mxu0 0.0
  %76 = vmatprep.subr.mxu0 0.0
  %77 = vmatpush1.msra.mxu0 0.0
  %78 = vmatprep.subr.mxu0 0.0
  %79 = vmatpush1.msra.mxu0 0.0
  %80 = vmatprep.subr.mxu0 0.0
  %81 = vmatpush1.msra.mxu0 0.0
  %82 = vmatprep.subr.mxu0 0.0
  %83 = vmatpush1.msra.mxu0 0.0
  %84 = vmatprep.subr.mxu0 0.0
  %85 = vmatpush1.msra.mxu0 0.0
  %86 = vmatprep.subr.mxu0 0.0
  %87 = vmatpush1.msra.mxu0 0.0
  %88 = vmatprep.subr.mxu0 0.0
  %89 = vmatpush1.msra.mxu0 0.0
  %90 = vmatprep.subr.mxu0 0.0
  %91 = vmatpush1.msra.mxu0 0.0
  %92 = vmatprep.subr.mxu0 0.0
  %93 = vmatpush1.msra.mxu0 0.0
  %94 = vmatprep.mubr.f32.mxu0 0.0
  %95 = vmatmul.mubr.f32.gmra.mrb[0].mxu0 %v25
  %v96 = vpop.f32.mrb[0].mxu0
  %v97 = vadd.f32 %v17, %v96
  %v98 = vpop.f32.mrb[0].mxu0
  %99 = vmatprep.mubr.f32.mxu0 0.0
  %100 = vmatmul.mubr.f32.gmra.mrb[0].mxu0 %v28
  %v101 = vpop.f32.mrb[0].mxu0
  %v102 = vadd.f32 %v18, %v101
  %v103 = vpop.f32.mrb[0].mxu0
  %104 = vdwg.mxu0
  %v105 = vtanh.pop %v97
  %v106 = vtanh.pop %v102
  %v107 = vld [vmem:[%s1 + $0x160] sm:$0xff]
  %v108 = vld [vmem:[%s1 + $0x168] sm:$0xff]
  %v109 = vld [vmem:[%s1 + $0x170] sm:$0xff]
  %v110 = vld [vmem:[%s1 + $0x178] sm:$0xff]
  %vm111 = vcmask 523264
  %v112 = vsel %vm111, %v105, 0.0
  %113 = vadd.xlane.f32.xlu0 %v112
  %v114 = vpop.xlane.xlu0 %113
  %v115 = vsel %vm111, %v106, 0.0
  %116 = vadd.xlane.f32.xlu0 %v115
  %v117 = vpop.xlane.xlu0 %116
  %v118 = vrcp.pop 64.0
  %v119 = vmul.f32 %v114, %v118
  %v120 = vmul.f32 %v117, %v118
  %v121 = vsub.f32 %v105, %v119
  %v122 = vsub.f32 %v106, %v120
  %v123 = vmul.f32 %v121, %v121
  %v124 = vmul.f32 %v122, %v122
  %v125 = vsel %vm111, %v123, 0.0
  %126 = vadd.xlane.f32.xlu0 %v125
  %v127 = vpop.xlane.xlu0 %126
  %v128 = vsel %vm111, %v124, 0.0
  %129 = vadd.xlane.f32.xlu0 %v128
  %v130 = vpop.xlane.xlu0 %129
  %v131 = vmul.f32 %v127, %v118
  %v132 = vmul.f32 %v130, %v118
  %v133 = vadd.f32 %v131, 1e-05
  %v134 = vadd.f32 %v132, 1e-05
  %v135 = vrsqrt.pop %v133
  %v136 = vrsqrt.pop %v134
  %v137 = vmul.f32 %v121, %v135
  %v138 = vmul.f32 %v122, %v136
  %v139 = vmul.f32 %v137, %v107
  %v140 = vmul.f32 %v138, %v108
  %v141 = vadd.f32 %v139, %v109
  %v142 = vadd.f32 %v140, %v110
  %v143 = vld [vmem:[%s2] sm:$0xff]
  %v144 = vld [vmem:[%s2 + $0x8] sm:$0xff]
  %v145 = vld [vmem:[%s2 + $0x20] sm:$0xff]
  %v146 = vld [vmem:[%s2 + $0x28] sm:$0xff]
  %v147 = vld [vmem:[%s2 + $0x40] sm:$0xff]
  %v148 = vld [vmem:[%s2 + $0x48] sm:$0xff]
  %v149 = vld [vmem:[%s2 + $0x60] sm:$0xff]
  %v150 = vld [vmem:[%s2 + $0x68] sm:$0xff]
  %v151 = vld [vmem:[%s2 + $0x80] sm:$0xff]
  %v152 = vld [vmem:[%s2 + $0x88] sm:$0xff]
  %v153 = vld [vmem:[%s2 + $0xa0] sm:$0xff]
  %v154 = vld [vmem:[%s2 + $0xa8] sm:$0xff]
  %v155 = vld [vmem:[%s2 + $0xc0] sm:$0xff]
  %v156 = vld [vmem:[%s2 + $0xc8] sm:$0xff]
  %v157 = vld [vmem:[%s2 + $0xe0] sm:$0xff]
  %v158 = vld [vmem:[%s2 + $0xe8] sm:$0xff]
  %v160 = vsel %vm111, %v141, 0
  %v163 = vsel %vm111, %v142, 0
  %165 = vmatprep.subr.mxu0 %v144
  %166 = vmatpush1.msra.mxu0 %v143
  %167 = vmatprep.subr.mxu0 %v146
  %168 = vmatpush1.msra.mxu0 %v145
  %169 = vmatprep.subr.mxu0 %v148
  %170 = vmatpush1.msra.mxu0 %v147
  %171 = vmatprep.subr.mxu0 %v150
  %172 = vmatpush1.msra.mxu0 %v149
  %173 = vmatprep.subr.mxu0 %v152
  %174 = vmatpush1.msra.mxu0 %v151
  %175 = vmatprep.subr.mxu0 %v154
  %176 = vmatpush1.msra.mxu0 %v153
  %177 = vmatprep.subr.mxu0 %v156
  %178 = vmatpush1.msra.mxu0 %v155
  %179 = vmatprep.subr.mxu0 %v158
  %180 = vmatpush1.msra.mxu0 %v157
  %181 = vmatprep.subr.mxu0 0.0
  %182 = vmatpush1.msra.mxu0 0.0
  %183 = vmatprep.subr.mxu0 0.0
  %184 = vmatpush1.msra.mxu0 0.0
  %185 = vmatprep.subr.mxu0 0.0
  %186 = vmatpush1.msra.mxu0 0.0
  %187 = vmatprep.subr.mxu0 0.0
  %188 = vmatpush1.msra.mxu0 0.0
  %189 = vmatprep.subr.mxu0 0.0
  %190 = vmatpush1.msra.mxu0 0.0
  %191 = vmatprep.subr.mxu0 0.0
  %192 = vmatpush1.msra.mxu0 0.0
  %193 = vmatprep.subr.mxu0 0.0
  %194 = vmatpush1.msra.mxu0 0.0
  %195 = vmatprep.subr.mxu0 0.0
  %196 = vmatpush1.msra.mxu0 0.0
  %197 = vmatprep.subr.mxu0 0.0
  %198 = vmatpush1.msra.mxu0 0.0
  %199 = vmatprep.subr.mxu0 0.0
  %200 = vmatpush1.msra.mxu0 0.0
  %201 = vmatprep.subr.mxu0 0.0
  %202 = vmatpush1.msra.mxu0 0.0
  %203 = vmatprep.subr.mxu0 0.0
  %204 = vmatpush1.msra.mxu0 0.0
  %205 = vmatprep.subr.mxu0 0.0
  %206 = vmatpush1.msra.mxu0 0.0
  %207 = vmatprep.subr.mxu0 0.0
  %208 = vmatpush1.msra.mxu0 0.0
  %209 = vmatprep.subr.mxu0 0.0
  %210 = vmatpush1.msra.mxu0 0.0
  %211 = vmatprep.subr.mxu0 0.0
  %212 = vmatpush1.msra.mxu0 0.0
  %213 = vmatprep.subr.mxu0 0.0
  %214 = vmatpush1.msra.mxu0 0.0
  %215 = vmatprep.subr.mxu0 0.0
  %216 = vmatpush1.msra.mxu0 0.0
  %217 = vmatprep.subr.mxu0 0.0
  %218 = vmatpush1.msra.mxu0 0.0
  %219 = vmatprep.subr.mxu0 0.0
  %220 = vmatpush1.msra.mxu0 0.0
  %221 = vmatprep.subr.mxu0 0.0
  %222 = vmatpush1.msra.mxu0 0.0
  %223 = vmatprep.subr.mxu0 0.0
  %224 = vmatpush1.msra.mxu0 0.0
  %225 = vmatprep.subr.mxu0 0.0
  %226 = vmatpush1.msra.mxu0 0.0
  %227 = vmatprep.subr.mxu0 0.0
  %228 = vmatpush1.msra.mxu0 0.0
  %229 = vmatprep.mubr.f32.mxu0 0.0
  %230 = vmatmul.mubr.f32.gmra.mrb[0].mxu0 %v160
  %v231 = vpop.f32.mrb[0].mxu0
  %v232 = vadd.f32 0.0, %v231
  %v233 = vpop.f32.mrb[0].mxu0
  %v234 = vadd.f32 0.0, %v233
  %235 = vmatprep.mubr.f32.mxu0 0.0
  %236 = vmatmul.mubr.f32.gmra.mrb[0].mxu0 %v163
  %v237 = vpop.f32.mrb[0].mxu0
  %v238 = vadd.f32 0.0, %v237
  %v239 = vpop.f32.mrb[0].mxu0
  %v240 = vadd.f32 0.0, %v239
  %241 = vdwg.mxu0
  %v242 = vld [vmem:[%s1 + $0x180] sm:$0xff]
  %v243 = vld [vmem:[%s1 + $0x188] sm:$0xff]
  %v244 = vadd.f32 %v232, %v242
  %v245 = vadd.f32 %v238, %v243
  %v246 = vld [vmem:[%s1 + $0x190] sm:$0xff]
  %v247 = vld [vmem:[%s1 + $0x198] sm:$0xff]
  %250 = vrot.lane.b32.xlu0 %v246, 64
  %v251 = vpop.permute.xlu0 %250
  %252 = vrot.lane.b32.xlu0 %v247, 64
  %v253 = vpop.permute.xlu0 %252
  %v256 = vadd.f32 %v232, %v251
  %v257 = vadd.f32 %v238, %v253
  %v258 = vld [vmem:[%s1 + $0x1a0] sm:$0xff]
  %v259 = vld [vmem:[%s1 + $0x1a8] sm:$0xff]
  %v260 = vadd.f32 %v234, %v258
  %v261 = vadd.f32 %v240, %v259
  %264 = vrot.lane.b32.xlu0 %v256, 64
  %v265 = vpop.permute.xlu0 %264
  %266 = vrot.lane.b32.xlu0 %v257, 64
  %v267 = vpop.permute.xlu0 %266
  %270 = vxpose.xlu0.b32.start [1/16] %v265, 128
  %271 = vxpose.xlu0.b32.cont [2/16] %v267, 128
  %272 = vxpose.xlu0.b32.cont [3/16] 0.0, 128
  %273 = vxpose.xlu0.b32.cont [4/16] 0.0, 128
  %274 = vxpose.xlu0.b32.cont [5/16] 0.0, 128
  %275 = vxpose.xlu0.b32.cont [6/16] 0.0, 128
  %276 = vxpose.xlu0.b32.cont [7/16] 0.0, 128
  %277 = vxpose.xlu0.b32.cont [8/16] 0.0, 128
  %278 = vxpose.xlu0.b32.cont [9/16] 0.0, 128
  %279 = vxpose.xlu0.b32.cont [10/16] 0.0, 128
  %280 = vxpose.xlu0.b32.cont [11/16] 0.0, 128
  %281 = vxpose.xlu0.b32.cont [12/16] 0.0, 128
  %282 = vxpose.xlu0.b32.cont [13/16] 0.0, 128
  %283 = vxpose.xlu0.b32.cont [14/16] 0.0, 128
  %284 = vxpose.xlu0.b32.cont [15/16] 0.0, 128
  %285 = vxpose.xlu0.b32.end [16/16] 0.0, 128
  %v286 = vpop.trf.xlu0
  %v287 = vpop.trf.xlu0
  %v288 = vpop.trf.xlu0
  %v289 = vpop.trf.xlu0
  %v290 = vpop.trf.xlu0
  %v291 = vpop.trf.xlu0
  %v292 = vpop.trf.xlu0
  %v293 = vpop.trf.xlu0
  %v294 = vpop.trf.xlu0
  %v295 = vpop.trf.xlu0
  %v296 = vpop.trf.xlu0
  %v297 = vpop.trf.xlu0
  %v298 = vpop.trf.xlu0
  %v299 = vpop.trf.xlu0
  %v300 = vpop.trf.xlu0
  %v301 = vpop.trf.xlu0
  %310 = vrot.lane.b32.xlu0 %v286, 16
  %v311 = vpop.permute.xlu0 %310
  %312 = vrot.lane.b32.xlu0 %v287, 16
  %v313 = vpop.permute.xlu0 %312
  %314 = vrot.lane.b32.xlu0 %v288, 16
  %v315 = vpop.permute.xlu0 %314
  %316 = vrot.lane.b32.xlu0 %v289, 16
  %v317 = vpop.permute.xlu0 %316
  %318 = vrot.lane.b32.xlu0 %v290, 16
  %v319 = vpop.permute.xlu0 %318
  %320 = vrot.lane.b32.xlu0 %v291, 16
  %v321 = vpop.permute.xlu0 %320
  %322 = vrot.lane.b32.xlu0 %v292, 16
  %v323 = vpop.permute.xlu0 %322
  %324 = vrot.lane.b32.xlu0 %v293, 16
  %v325 = vpop.permute.xlu0 %324
  %334 = vrot.lane.b32.xlu0 %v286, 32
  %v335 = vpop.permute.xlu0 %334
  %336 = vrot.lane.b32.xlu0 %v287, 32
  %v337 = vpop.permute.xlu0 %336
  %338 = vrot.lane.b32.xlu0 %v288, 32
  %v339 = vpop.permute.xlu0 %338
  %340 = vrot.lane.b32.xlu0 %v289, 32
  %v341 = vpop.permute.xlu0 %340
  %342 = vrot.lane.b32.xlu0 %v290, 32
  %v343 = vpop.permute.xlu0 %342
  %344 = vrot.lane.b32.xlu0 %v291, 32
  %v345 = vpop.permute.xlu0 %344
  %346 = vrot.lane.b32.xlu0 %v292, 32
  %v347 = vpop.permute.xlu0 %346
  %348 = vrot.lane.b32.xlu0 %v293, 32
  %v349 = vpop.permute.xlu0 %348
  %358 = vrot.lane.b32.xlu0 %v286, 48
  %v359 = vpop.permute.xlu0 %358
  %360 = vrot.lane.b32.xlu0 %v287, 48
  %v361 = vpop.permute.xlu0 %360
  %362 = vrot.lane.b32.xlu0 %v288, 48
  %v363 = vpop.permute.xlu0 %362
  %364 = vrot.lane.b32.xlu0 %v289, 48
  %v365 = vpop.permute.xlu0 %364
  %366 = vrot.lane.b32.xlu0 %v290, 48
  %v367 = vpop.permute.xlu0 %366
  %368 = vrot.lane.b32.xlu0 %v291, 48
  %v369 = vpop.permute.xlu0 %368
  %370 = vrot.lane.b32.xlu0 %v292, 48
  %v371 = vpop.permute.xlu0 %370
  %372 = vrot.lane.b32.xlu0 %v293, 48
  %v373 = vpop.permute.xlu0 %372
  %382 = vrot.lane.b32.xlu0 %v286, 64
  %v383 = vpop.permute.xlu0 %382
  %384 = vrot.lane.b32.xlu0 %v287, 64
  %v385 = vpop.permute.xlu0 %384
  %386 = vrot.lane.b32.xlu0 %v288, 64
  %v387 = vpop.permute.xlu0 %386
  %388 = vrot.lane.b32.xlu0 %v289, 64
  %v389 = vpop.permute.xlu0 %388
  %390 = vrot.lane.b32.xlu0 %v290, 64
  %v391 = vpop.permute.xlu0 %390
  %392 = vrot.lane.b32.xlu0 %v291, 64
  %v393 = vpop.permute.xlu0 %392
  %394 = vrot.lane.b32.xlu0 %v292, 64
  %v395 = vpop.permute.xlu0 %394
  %396 = vrot.lane.b32.xlu0 %v293, 64
  %v397 = vpop.permute.xlu0 %396
  %406 = vrot.lane.b32.xlu0 %v286, 80
  %v407 = vpop.permute.xlu0 %406
  %408 = vrot.lane.b32.xlu0 %v287, 80
  %v409 = vpop.permute.xlu0 %408
  %410 = vrot.lane.b32.xlu0 %v288, 80
  %v411 = vpop.permute.xlu0 %410
  %412 = vrot.lane.b32.xlu0 %v289, 80
  %v413 = vpop.permute.xlu0 %412
  %414 = vrot.lane.b32.xlu0 %v290, 80
  %v415 = vpop.permute.xlu0 %414
  %416 = vrot.lane.b32.xlu0 %v291, 80
  %v417 = vpop.permute.xlu0 %416
  %418 = vrot.lane.b32.xlu0 %v292, 80
  %v419 = vpop.permute.xlu0 %418
  %420 = vrot.lane.b32.xlu0 %v293, 80
  %v421 = vpop.permute.xlu0 %420
  %430 = vrot.lane.b32.xlu0 %v286, 96
  %v431 = vpop.permute.xlu0 %430
  %432 = vrot.lane.b32.xlu0 %v287, 96
  %v433 = vpop.permute.xlu0 %432
  %434 = vrot.lane.b32.xlu0 %v288, 96
  %v435 = vpop.permute.xlu0 %434
  %436 = vrot.lane.b32.xlu0 %v289, 96
  %v437 = vpop.permute.xlu0 %436
  %438 = vrot.lane.b32.xlu0 %v290, 96
  %v439 = vpop.permute.xlu0 %438
  %440 = vrot.lane.b32.xlu0 %v291, 96
  %v441 = vpop.permute.xlu0 %440
  %442 = vrot.lane.b32.xlu0 %v292, 96
  %v443 = vpop.permute.xlu0 %442
  %444 = vrot.lane.b32.xlu0 %v293, 96
  %v445 = vpop.permute.xlu0 %444
  %454 = vrot.lane.b32.xlu0 %v286, 112
  %v455 = vpop.permute.xlu0 %454
  %456 = vrot.lane.b32.xlu0 %v287, 112
  %v457 = vpop.permute.xlu0 %456
  %458 = vrot.lane.b32.xlu0 %v288, 112
  %v459 = vpop.permute.xlu0 %458
  %460 = vrot.lane.b32.xlu0 %v289, 112
  %v461 = vpop.permute.xlu0 %460
  %462 = vrot.lane.b32.xlu0 %v290, 112
  %v463 = vpop.permute.xlu0 %462
  %464 = vrot.lane.b32.xlu0 %v291, 112
  %v465 = vpop.permute.xlu0 %464
  %466 = vrot.lane.b32.xlu0 %v292, 112
  %v467 = vpop.permute.xlu0 %466
  %468 = vrot.lane.b32.xlu0 %v293, 112
  %v469 = vpop.permute.xlu0 %468
  %vm478 = vcmask 130048
  %v479 = vsel %vm478, %v286, %v311
  %v480 = vsel %vm478, %v287, %v313
  %v481 = vsel %vm478, %v288, %v315
  %v482 = vsel %vm478, %v289, %v317
  %v483 = vsel %vm478, %v290, %v319
  %v484 = vsel %vm478, %v291, %v321
  %v485 = vsel %vm478, %v292, %v323
  %v486 = vsel %vm478, %v293, %v325
  %vm487 = vcmask 261120
  %v488 = vsel %vm487, %v479, %v335
  %v489 = vsel %vm487, %v480, %v337
  %v490 = vsel %vm487, %v481, %v339
  %v491 = vsel %vm487, %v482, %v341
  %v492 = vsel %vm487, %v483, %v343
  %v493 = vsel %vm487, %v484, %v345
  %v494 = vsel %vm487, %v485, %v347
  %v495 = vsel %vm487, %v486, %v349
  %vm496 = vcmask 392192
  %v497 = vsel %vm496, %v488, %v359
  %v498 = vsel %vm496, %v489, %v361
  %v499 = vsel %vm496, %v490, %v363
  %v500 = vsel %vm496, %v491, %v365
  %v501 = vsel %vm496, %v492, %v367
  %v502 = vsel %vm496, %v493, %v369
  %v503 = vsel %vm496, %v494, %v371
  %v504 = vsel %vm496, %v495, %v373
  %v505 = vsel %vm111, %v497, %v383
  %v506 = vsel %vm111, %v498, %v385
  %v507 = vsel %vm111, %v499, %v387
  %v508 = vsel %vm111, %v500, %v389
  %v509 = vsel %vm111, %v501, %v391
  %v510 = vsel %vm111, %v502, %v393
  %v511 = vsel %vm111, %v503, %v395
  %v512 = vsel %vm111, %v504, %v397
  %vm513 = vcmask 654336
  %v514 = vsel %vm513, %v505, %v407
  %v515 = vsel %vm513, %v506, %v409
  %v516 = vsel %vm513, %v507, %v411
  %v517 = vsel %vm513, %v508, %v413
  %v518 = vsel %vm513, %v509, %v415
  %v519 = vsel %vm513, %v510, %v417
  %v520 = vsel %vm513, %v511, %v419
  %v521 = vsel %vm513, %v512, %v421
  %vm522 = vcmask 785408
  %v523 = vsel %vm522, %v514, %v431
  %v524 = vsel %vm522, %v515, %v433
  %v525 = vsel %vm522, %v516, %v435
  %v526 = vsel %vm522, %v517, %v437
  %v527 = vsel %vm522, %v518, %v439
  %v528 = vsel %vm522, %v519, %v441
  %v529 = vsel %vm522, %v520, %v443
  %v530 = vsel %vm522, %v521, %v445
  %vm531 = vcmask 916480
  %v532 = vsel %vm531, %v523, %v455
  %v533 = vsel %vm531, %v524, %v457
  %v534 = vsel %vm531, %v525, %v459
  %v535 = vsel %vm531, %v526, %v461
  %v536 = vsel %vm531, %v527, %v463
  %v537 = vsel %vm531, %v528, %v465
  %v538 = vsel %vm531, %v529, %v467
  %v539 = vsel %vm531, %v530, %v469
  %v540 = vld [vmem:[%s1 + $0x90] sm:$0xff]
  %v541 = vld [vmem:[%s1 + $0x98] sm:$0xff]
  %v542 = vld [vmem:[%s1 + $0xa0] sm:$0xff]
  %v543 = vld [vmem:[%s1 + $0xa8] sm:$0xff]
  %v544 = vld [vmem:[%s1 + $0xb0] sm:$0xff]
  %v545 = vld [vmem:[%s1 + $0xb8] sm:$0xff]
  %v546 = vld [vmem:[%s1 + $0xc0] sm:$0xff]
  %v547 = vld [vmem:[%s1 + $0xc8] sm:$0xff]
  %v548 = vmul.f32 %v532, %v540
  %v549 = vmul.f32 %v533, %v541
  %v550 = vmul.f32 %v534, %v542
  %v551 = vmul.f32 %v535, %v543
  %v552 = vmul.f32 %v536, %v544
  %v553 = vmul.f32 %v537, %v545
  %v554 = vmul.f32 %v538, %v546
  %v555 = vmul.f32 %v539, %v547
  %v556 = vld [vmem:[%s1 + $0xd0] sm:$0xff]
  %v557 = vld [vmem:[%s1 + $0xd8] sm:$0xff]
  %v558 = vld [vmem:[%s1 + $0xe0] sm:$0xff]
  %v559 = vld [vmem:[%s1 + $0xe8] sm:$0xff]
  %v560 = vld [vmem:[%s1 + $0xf0] sm:$0xff]
  %v561 = vld [vmem:[%s1 + $0xf8] sm:$0xff]
  %v562 = vld [vmem:[%s1 + $0x100] sm:$0xff]
  %v563 = vld [vmem:[%s1 + $0x108] sm:$0xff]
  %v564 = vld [vmem:[%s1 + $0x110] sm:$0xff]
  %v565 = vld [vmem:[%s1 + $0x118] sm:$0xff]
  %v566 = vld [vmem:[%s1 + $0x120] sm:$0xff]
  %v567 = vld [vmem:[%s1 + $0x128] sm:$0xff]
  %v568 = vld [vmem:[%s1 + $0x130] sm:$0xff]
  %v569 = vld [vmem:[%s1 + $0x138] sm:$0xff]
  %v570 = vld [vmem:[%s1 + $0x140] sm:$0xff]
  %v571 = vld [vmem:[%s1 + $0x148] sm:$0xff]
  %v572 = vmul.f32 %v260, %v556
  %v573 = vmul.f32 %v261, %v557
  %v574 = vmul.f32 %v260, %v558
  %v575 = vmul.f32 %v261, %v559
  %v576 = vmul.f32 %v260, %v560
  %v577 = vmul.f32 %v261, %v561
  %v578 = vmul.f32 %v260, %v562
  %v579 = vmul.f32 %v261, %v563
  %v580 = vmul.f32 %v260, %v564
  %v581 = vmul.f32 %v261, %v565
  %v582 = vmul.f32 %v260, %v566
  %v583 = vmul.f32 %v261, %v567
  %v584 = vmul.f32 %v260, %v568
  %v585 = vmul.f32 %v261, %v569
  %v586 = vmul.f32 %v260, %v570
  %v587 = vmul.f32 %v261, %v571
  %v589 = vsel %vm111, %v244, 0
  %v592 = vsel %vm111, %v245, 0
  %594 = vmatprep.subr.mxu0 0.0
  %595 = vmatpush1.msra.mxu0 %v548
  %596 = vmatprep.subr.mxu0 0.0
  %597 = vmatpush1.msra.mxu0 %v549
  %598 = vmatprep.subr.mxu0 0.0
  %599 = vmatpush1.msra.mxu0 %v550
  %600 = vmatprep.subr.mxu0 0.0
  %601 = vmatpush1.msra.mxu0 %v551
  %602 = vmatprep.subr.mxu0 0.0
  %603 = vmatpush1.msra.mxu0 %v552
  %604 = vmatprep.subr.mxu0 0.0
  %605 = vmatpush1.msra.mxu0 %v553
  %606 = vmatprep.subr.mxu0 0.0
  %607 = vmatpush1.msra.mxu0 %v554
  %608 = vmatprep.subr.mxu0 0.0
  %609 = vmatpush1.msra.mxu0 %v555
  %610 = vmatprep.subr.mxu0 0.0
  %611 = vmatpush1.msra.mxu0 0.0
  %612 = vmatprep.subr.mxu0 0.0
  %613 = vmatpush1.msra.mxu0 0.0
  %614 = vmatprep.subr.mxu0 0.0
  %615 = vmatpush1.msra.mxu0 0.0
  %616 = vmatprep.subr.mxu0 0.0
  %617 = vmatpush1.msra.mxu0 0.0
  %618 = vmatprep.subr.mxu0 0.0
  %619 = vmatpush1.msra.mxu0 0.0
  %620 = vmatprep.subr.mxu0 0.0
  %621 = vmatpush1.msra.mxu0 0.0
  %622 = vmatprep.subr.mxu0 0.0
  %623 = vmatpush1.msra.mxu0 0.0
  %624 = vmatprep.subr.mxu0 0.0
  %625 = vmatpush1.msra.mxu0 0.0
  %626 = vmatprep.subr.mxu0 0.0
  %627 = vmatpush1.msra.mxu0 0.0
  %628 = vmatprep.subr.mxu0 0.0
  %629 = vmatpush1.msra.mxu0 0.0
  %630 = vmatprep.subr.mxu0 0.0
  %631 = vmatpush1.msra.mxu0 0.0
  %632 = vmatprep.subr.mxu0 0.0
  %633 = vmatpush1.msra.mxu0 0.0
  %634 = vmatprep.subr.mxu0 0.0
  %635 = vmatpush1.msra.mxu0 0.0
  %636 = vmatprep.subr.mxu0 0.0
  %637 = vmatpush1.msra.mxu0 0.0
  %638 = vmatprep.subr.mxu0 0.0
  %639 = vmatpush1.msra.mxu0 0.0
  %640 = vmatprep.subr.mxu0 0.0
  %641 = vmatpush1.msra.mxu0 0.0
  %642 = vmatprep.subr.mxu0 0.0
  %643 = vmatpush1.msra.mxu0 0.0
  %644 = vmatprep.subr.mxu0 0.0
  %645 = vmatpush1.msra.mxu0 0.0
  %646 = vmatprep.subr.mxu0 0.0
  %647 = vmatpush1.msra.mxu0 0.0
  %648 = vmatprep.subr.mxu0 0.0
  %649 = vmatpush1.msra.mxu0 0.0
  %650 = vmatprep.subr.mxu0 0.0
  %651 = vmatpush1.msra.mxu0 0.0
  %652 = vmatprep.subr.mxu0 0.0
  %653 = vmatpush1.msra.mxu0 0.0
  %654 = vmatprep.subr.mxu0 0.0
  %655 = vmatpush1.msra.mxu0 0.0
  %656 = vmatprep.subr.mxu0 0.0
  %657 = vmatpush1.msra.mxu0 0.0
  %658 = vmatprep.mubr.f32.mxu0 0.0
  %659 = vmatmul.mubr.f32.gmra.mrb[0].mxu0 %v589
  %v660 = vpop.f32.mrb[0].mxu0
  %v661 = vadd.f32 0.0, %v660
  %v662 = vpop.f32.mrb[0].mxu0
  %663 = vmatprep.mubr.f32.mxu0 0.0
  %664 = vmatmul.mubr.f32.gmra.mrb[0].mxu0 %v592
  %v665 = vpop.f32.mrb[0].mxu0
  %v666 = vadd.f32 0.0, %v665
  %v667 = vpop.f32.mrb[0].mxu0
  %668 = vdwg.mxu0
  %v669 = vmul.f32 %v661, 0.35355338
  %v670 = vmul.f32 %v666, 0.35355338
  %v671 = vld [vmem:[%s1 + $0x80] sm:$0xff]
  %v672 = vld [vmem:[%s1 + $0x88] sm:$0xff]
  %v673 = vadd.f32 %v669, %v671
  %v674 = vadd.f32 %v670, %v672
  %675 = vmax.xlane.f32.xlu0 %v673
  %v676 = vpop.xlane.xlu0 %675
  %677 = vmax.xlane.f32.xlu0 %v674
  %v678 = vpop.xlane.xlu0 %677
  %v679 = vsub.f32 %v673, %v676
  %v680 = vsub.f32 %v674, %v678
  %v681 = vmul.f32 %v679, 1.442695
  %v682 = vpow.pop %v681
  %v683 = vmul.f32 %v680, 1.442695
  %v684 = vpow.pop %v683
  %v685 = vld [vmem:[%s1] sm:$0xff]
  %v686 = vld [vmem:[%s1 + $0x8] sm:$0xff]
  %v687 = vld [vmem:[%s1 + $0x10] sm:$0xff]
  %v688 = vld [vmem:[%s1 + $0x18] sm:$0xff]
  %v689 = vld [vmem:[%s1 + $0x20] sm:$0xff]
  %v690 = vld [vmem:[%s1 + $0x28] sm:$0xff]
  %v691 = vld [vmem:[%s1 + $0x30] sm:$0xff]
  %v692 = vld [vmem:[%s1 + $0x38] sm:$0xff]
  %v693 = vld [vmem:[%s1 + $0x40] sm:$0xff]
  %v694 = vld [vmem:[%s1 + $0x48] sm:$0xff]
  %v695 = vld [vmem:[%s1 + $0x50] sm:$0xff]
  %v696 = vld [vmem:[%s1 + $0x58] sm:$0xff]
  %v697 = vld [vmem:[%s1 + $0x60] sm:$0xff]
  %v698 = vld [vmem:[%s1 + $0x68] sm:$0xff]
  %v699 = vld [vmem:[%s1 + $0x70] sm:$0xff]
  %v700 = vld [vmem:[%s1 + $0x78] sm:$0xff]
  %701 = vmatprep.subr.mxu0 0.0
  %702 = vmatpush1.msra.mxu0 %v685
  %703 = vmatprep.subr.mxu0 0.0
  %704 = vmatpush1.msra.mxu0 %v686
  %705 = vmatprep.subr.mxu0 0.0
  %706 = vmatpush1.msra.mxu0 %v687
  %707 = vmatprep.subr.mxu0 0.0
  %708 = vmatpush1.msra.mxu0 %v688
  %709 = vmatprep.subr.mxu0 0.0
  %710 = vmatpush1.msra.mxu0 %v689
  %711 = vmatprep.subr.mxu0 0.0
  %712 = vmatpush1.msra.mxu0 %v690
  %713 = vmatprep.subr.mxu0 0.0
  %714 = vmatpush1.msra.mxu0 %v691
  %715 = vmatprep.subr.mxu0 0.0
  %716 = vmatpush1.msra.mxu0 %v692
  %717 = vmatprep.subr.mxu0 0.0
  %718 = vmatpush1.msra.mxu0 %v693
  %719 = vmatprep.subr.mxu0 0.0
  %720 = vmatpush1.msra.mxu0 %v694
  %721 = vmatprep.subr.mxu0 0.0
  %722 = vmatpush1.msra.mxu0 %v695
  %723 = vmatprep.subr.mxu0 0.0
  %724 = vmatpush1.msra.mxu0 %v696
  %725 = vmatprep.subr.mxu0 0.0
  %726 = vmatpush1.msra.mxu0 %v697
  %727 = vmatprep.subr.mxu0 0.0
  %728 = vmatpush1.msra.mxu0 %v698
  %729 = vmatprep.subr.mxu0 0.0
  %730 = vmatpush1.msra.mxu0 %v699
  %731 = vmatprep.subr.mxu0 0.0
  %732 = vmatpush1.msra.mxu0 %v700
  %733 = vmatprep.subr.mxu0 0.0
  %734 = vmatpush1.msra.mxu0 0.0
  %735 = vmatprep.subr.mxu0 0.0
  %736 = vmatpush1.msra.mxu0 0.0
  %737 = vmatprep.subr.mxu0 0.0
  %738 = vmatpush1.msra.mxu0 0.0
  %739 = vmatprep.subr.mxu0 0.0
  %740 = vmatpush1.msra.mxu0 0.0
  %741 = vmatprep.subr.mxu0 0.0
  %742 = vmatpush1.msra.mxu0 0.0
  %743 = vmatprep.subr.mxu0 0.0
  %744 = vmatpush1.msra.mxu0 0.0
  %745 = vmatprep.subr.mxu0 0.0
  %746 = vmatpush1.msra.mxu0 0.0
  %747 = vmatprep.subr.mxu0 0.0
  %748 = vmatpush1.msra.mxu0 0.0
  %749 = vmatprep.subr.mxu0 0.0
  %750 = vmatpush1.msra.mxu0 0.0
  %751 = vmatprep.subr.mxu0 0.0
  %752 = vmatpush1.msra.mxu0 0.0
  %753 = vmatprep.subr.mxu0 0.0
  %754 = vmatpush1.msra.mxu0 0.0
  %755 = vmatprep.subr.mxu0 0.0
  %756 = vmatpush1.msra.mxu0 0.0
  %757 = vmatprep.subr.mxu0 0.0
  %758 = vmatpush1.msra.mxu0 0.0
  %759 = vmatprep.subr.mxu0 0.0
  %760 = vmatpush1.msra.mxu0 0.0
  %761 = vmatprep.subr.mxu0 0.0
  %762 = vmatpush1.msra.mxu0 0.0
  %763 = vmatprep.subr.mxu0 0.0
  %764 = vmatpush1.msra.mxu0 0.0
  %765 = vmatprep.mubr.f32.mxu0 0.0
  %766 = vmatmul.mubr.f32.gmra.mrb[0].mxu0 %v682
  %v767 = vpop.f32.mrb[0].mxu0
  %v768 = vadd.f32 0.0, %v767
  %v769 = vpop.f32.mrb[0].mxu0
  %770 = vmatprep.mubr.f32.mxu0 0.0
  %771 = vmatmul.mubr.f32.gmra.mrb[0].mxu0 %v684
  %v772 = vpop.f32.mrb[0].mxu0
  %v773 = vadd.f32 0.0, %v772
  %v774 = vpop.f32.mrb[0].mxu0
  %775 = vdwg.mxu0
  %v776 = vrcp.pop %v768
  %v777 = vmul.f32 %v682, %v776
  %v778 = vrcp.pop %v773
  %v779 = vmul.f32 %v684, %v778
  %780 = vmatprep.subr.mxu0 0.0
  %781 = vmatpush1.msra.mxu0 %v572
  %782 = vmatprep.subr.mxu0 0.0
  %783 = vmatpush1.msra.mxu0 %v573
  %784 = vmatprep.subr.mxu0 0.0
  %785 = vmatpush1.msra.mxu0 %v574
  %786 = vmatprep.subr.mxu0 0.0
  %787 = vmatpush1.msra.mxu0 %v575
  %788 = vmatprep.subr.mxu0 0.0
  %789 = vmatpush1.msra.mxu0 %v576
  %790 = vmatprep.subr.mxu0 0.0
  %791 = vmatpush1.msra.mxu0 %v577
  %792 = vmatprep.subr.mxu0 0.0
  %793 = vmatpush1.msra.mxu0 %v578
  %794 = vmatprep.subr.mxu0 0.0
  %795 = vmatpush1.msra.mxu0 %v579
  %796 = vmatprep.subr.mxu0 0.0
  %797 = vmatpush1.msra.mxu0 %v580
  %798 = vmatprep.subr.mxu0 0.0
  %799 = vmatpush1.msra.mxu0 %v581
  %800 = vmatprep.subr.mxu0 0.0
  %801 = vmatpush1.msra.mxu0 %v582
  %802 = vmatprep.subr.mxu0 0.0
  %803 = vmatpush1.msra.mxu0 %v583
  %804 = vmatprep.subr.mxu0 0.0
  %805 = vmatpush1.msra.mxu0 %v584
  %806 = vmatprep.subr.mxu0 0.0
  %807 = vmatpush1.msra.mxu0 %v585
  %808 = vmatprep.subr.mxu0 0.0
  %809 = vmatpush1.msra.mxu0 %v586
  %810 = vmatprep.subr.mxu0 0.0
  %811 = vmatpush1.msra.mxu0 %v587
  %812 = vmatprep.subr.mxu0 0.0
  %813 = vmatpush1.msra.mxu0 0.0
  %814 = vmatprep.subr.mxu0 0.0
  %815 = vmatpush1.msra.mxu0 0.0
  %816 = vmatprep.subr.mxu0 0.0
  %817 = vmatpush1.msra.mxu0 0.0
  %818 = vmatprep.subr.mxu0 0.0
  %819 = vmatpush1.msra.mxu0 0.0
  %820 = vmatprep.subr.mxu0 0.0
  %821 = vmatpush1.msra.mxu0 0.0
  %822 = vmatprep.subr.mxu0 0.0
  %823 = vmatpush1.msra.mxu0 0.0
  %824 = vmatprep.subr.mxu0 0.0
  %825 = vmatpush1.msra.mxu0 0.0
  %826 = vmatprep.subr.mxu0 0.0
  %827 = vmatpush1.msra.mxu0 0.0
  %828 = vmatprep.subr.mxu0 0.0
  %829 = vmatpush1.msra.mxu0 0.0
  %830 = vmatprep.subr.mxu0 0.0
  %831 = vmatpush1.msra.mxu0 0.0
  %832 = vmatprep.subr.mxu0 0.0
  %833 = vmatpush1.msra.mxu0 0.0
  %834 = vmatprep.subr.mxu0 0.0
  %835 = vmatpush1.msra.mxu0 0.0
  %836 = vmatprep.subr.mxu0 0.0
  %837 = vmatpush1.msra.mxu0 0.0
  %838 = vmatprep.subr.mxu0 0.0
  %839 = vmatpush1.msra.mxu0 0.0
  %840 = vmatprep.subr.mxu0 0.0
  %841 = vmatpush1.msra.mxu0 0.0
  %842 = vmatprep.subr.mxu0 0.0
  %843 = vmatpush1.msra.mxu0 0.0
  %844 = vmatprep.mubr.f32.mxu0 0.0
  %845 = vmatmul.mubr.f32.gmra.mrb[0].mxu0 %v777
  %v846 = vpop.f32.mrb[0].mxu0
  %v847 = vadd.f32 0.0, %v846
  %v848 = vpop.f32.mrb[0].mxu0
  %849 = vmatprep.mubr.f32.mxu0 0.0
  %850 = vmatmul.mubr.f32.gmra.mrb[0].mxu0 %v779
  %v851 = vpop.f32.mrb[0].mxu0
  %v852 = vadd.f32 0.0, %v851
  %v853 = vpop.f32.mrb[0].mxu0
  %854 = vdwg.mxu0
  %v855 = vld [vmem:[%s1 + $0x1b0] sm:$0xff]
  %v856 = vld [vmem:[%s1 + $0x1b8] sm:$0xff]
  %865 = vrot.lane.b32.xlu0 %v144, 64
  %v866 = vpop.permute.xlu0 %865
  %867 = vrot.lane.b32.xlu0 %v146, 64
  %v868 = vpop.permute.xlu0 %867
  %869 = vrot.lane.b32.xlu0 %v148, 64
  %v870 = vpop.permute.xlu0 %869
  %871 = vrot.lane.b32.xlu0 %v150, 64
  %v872 = vpop.permute.xlu0 %871
  %873 = vrot.lane.b32.xlu0 %v152, 64
  %v874 = vpop.permute.xlu0 %873
  %875 = vrot.lane.b32.xlu0 %v154, 64
  %v876 = vpop.permute.xlu0 %875
  %877 = vrot.lane.b32.xlu0 %v156, 64
  %v878 = vpop.permute.xlu0 %877
  %879 = vrot.lane.b32.xlu0 %v158, 64
  %v880 = vpop.permute.xlu0 %879
  %v890 = vsel %vm111, %v847, 0
  %v893 = vsel %vm111, %v852, 0
  %895 = vmatprep.subr.mxu0 0.0
  %896 = vmatpush1.msra.mxu0 %v866
  %897 = vmatprep.subr.mxu0 0.0
  %898 = vmatpush1.msra.mxu0 %v868
  %899 = vmatprep.subr.mxu0 0.0
  %900 = vmatpush1.msra.mxu0 %v870
  %901 = vmatprep.subr.mxu0 0.0
  %902 = vmatpush1.msra.mxu0 %v872
  %903 = vmatprep.subr.mxu0 0.0
  %904 = vmatpush1.msra.mxu0 %v874
  %905 = vmatprep.subr.mxu0 0.0
  %906 = vmatpush1.msra.mxu0 %v876
  %907 = vmatprep.subr.mxu0 0.0
  %908 = vmatpush1.msra.mxu0 %v878
  %909 = vmatprep.subr.mxu0 0.0
  %910 = vmatpush1.msra.mxu0 %v880
  %911 = vmatprep.subr.mxu0 0.0
  %912 = vmatpush1.msra.mxu0 0.0
  %913 = vmatprep.subr.mxu0 0.0
  %914 = vmatpush1.msra.mxu0 0.0
  %915 = vmatprep.subr.mxu0 0.0
  %916 = vmatpush1.msra.mxu0 0.0
  %917 = vmatprep.subr.mxu0 0.0
  %918 = vmatpush1.msra.mxu0 0.0
  %919 = vmatprep.subr.mxu0 0.0
  %920 = vmatpush1.msra.mxu0 0.0
  %921 = vmatprep.subr.mxu0 0.0
  %922 = vmatpush1.msra.mxu0 0.0
  %923 = vmatprep.subr.mxu0 0.0
  %924 = vmatpush1.msra.mxu0 0.0
  %925 = vmatprep.subr.mxu0 0.0
  %926 = vmatpush1.msra.mxu0 0.0
  %927 = vmatprep.subr.mxu0 0.0
  %928 = vmatpush1.msra.mxu0 0.0
  %929 = vmatprep.subr.mxu0 0.0
  %930 = vmatpush1.msra.mxu0 0.0
  %931 = vmatprep.subr.mxu0 0.0
  %932 = vmatpush1.msra.mxu0 0.0
  %933 = vmatprep.subr.mxu0 0.0
  %934 = vmatpush1.msra.mxu0 0.0
  %935 = vmatprep.subr.mxu0 0.0
  %936 = vmatpush1.msra.mxu0 0.0
  %937 = vmatprep.subr.mxu0 0.0
  %938 = vmatpush1.msra.mxu0 0.0
  %939 = vmatprep.subr.mxu0 0.0
  %940 = vmatpush1.msra.mxu0 0.0
  %941 = vmatprep.subr.mxu0 0.0
  %942 = vmatpush1.msra.mxu0 0.0
  %943 = vmatprep.subr.mxu0 0.0
  %944 = vmatpush1.msra.mxu0 0.0
  %945 = vmatprep.subr.mxu0 0.0
  %946 = vmatpush1.msra.mxu0 0.0
  %947 = vmatprep.subr.mxu0 0.0
  %948 = vmatpush1.msra.mxu0 0.0
  %949 = vmatprep.subr.mxu0 0.0
  %950 = vmatpush1.msra.mxu0 0.0
  %951 = vmatprep.subr.mxu0 0.0
  %952 = vmatpush1.msra.mxu0 0.0
  %953 = vmatprep.subr.mxu0 0.0
  %954 = vmatpush1.msra.mxu0 0.0
  %955 = vmatprep.subr.mxu0 0.0
  %956 = vmatpush1.msra.mxu0 0.0
  %957 = vmatprep.subr.mxu0 0.0
  %958 = vmatpush1.msra.mxu0 0.0
  %959 = vmatprep.mubr.f32.mxu0 0.0
  %960 = vmatmul.mubr.f32.gmra.mrb[0].mxu0 %v890
  %v961 = vpop.f32.mrb[0].mxu0
  %v962 = vadd.f32 %v855, %v961
  %v963 = vpop.f32.mrb[0].mxu0
  %964 = vmatprep.mubr.f32.mxu0 0.0
  %965 = vmatmul.mubr.f32.gmra.mrb[0].mxu0 %v893
  %v966 = vpop.f32.mrb[0].mxu0
  %v967 = vadd.f32 %v856, %v966
  %v968 = vpop.f32.mrb[0].mxu0
  %969 = vdwg.mxu0
  %v970 = vld [vmem:[%s1 + $0x1c0] sm:$0xff]
  %v971 = vld [vmem:[%s1 + $0x1c8] sm:$0xff]
  %v972 = vld [vmem:[%s1 + $0x1d0] sm:$0xff]
  %v973 = vld [vmem:[%s1 + $0x1d8] sm:$0xff]
  %v974 = vsel %vm111, %v962, 0.0
  %975 = vadd.xlane.f32.xlu0 %v974
  %v976 = vpop.xlane.xlu0 %975
  %v977 = vsel %vm111, %v967, 0.0
  %978 = vadd.xlane.f32.xlu0 %v977
  %v979 = vpop.xlane.xlu0 %978
  %v980 = vmul.f32 %v976, %v118
  %v981 = vmul.f32 %v979, %v118
  %v982 = vsub.f32 %v962, %v980
  %v983 = vsub.f32 %v967, %v981
  %v984 = vmul.f32 %v982, %v982
  %v985 = vmul.f32 %v983, %v983
  %v986 = vsel %vm111, %v984, 0.0
  %987 = vadd.xlane.f32.xlu0 %v986
  %v988 = vpop.xlane.xlu0 %987
  %v989 = vsel %vm111, %v985, 0.0
  %990 = vadd.xlane.f32.xlu0 %v989
  %v991 = vpop.xlane.xlu0 %990
  %v992 = vmul.f32 %v988, %v118
  %v993 = vmul.f32 %v991, %v118
  %v994 = vadd.f32 %v992, 1e-05
  %v995 = vadd.f32 %v993, 1e-05
  %v996 = vrsqrt.pop %v994
  %v997 = vrsqrt.pop %v995
  %v998 = vmul.f32 %v982, %v996
  %v999 = vmul.f32 %v983, %v997
  %v1000 = vmul.f32 %v998, %v970
  %v1001 = vmul.f32 %v999, %v971
  %v1002 = vadd.f32 %v1000, %v972
  %v1003 = vadd.f32 %v1001, %v973
  %v1004 = vld [vmem:[%s2 + $0x10] sm:$0xff]
  %v1005 = vld [vmem:[%s2 + $0x30] sm:$0xff]
  %v1006 = vld [vmem:[%s2 + $0x50] sm:$0xff]
  %v1007 = vld [vmem:[%s2 + $0x70] sm:$0xff]
  %v1008 = vld [vmem:[%s2 + $0x90] sm:$0xff]
  %v1009 = vld [vmem:[%s2 + $0xb0] sm:$0xff]
  %v1010 = vld [vmem:[%s2 + $0xd0] sm:$0xff]
  %v1011 = vld [vmem:[%s2 + $0xf0] sm:$0xff]
  %v1012 = vld [vmem:[%s1 + $0x1e0] sm:$0xff]
  %v1013 = vld [vmem:[%s1 + $0x1e8] sm:$0xff]
  %v1015 = vsel %vm111, %v1002, 0
  %v1018 = vsel %vm111, %v1003, 0
  %1020 = vmatprep.subr.mxu0 0.0
  %1021 = vmatpush1.msra.mxu0 %v1004
  %1022 = vmatprep.subr.mxu0 0.0
  %1023 = vmatpush1.msra.mxu0 %v1005
  %1024 = vmatprep.subr.mxu0 0.0
  %1025 = vmatpush1.msra.mxu0 %v1006
  %1026 = vmatprep.subr.mxu0 0.0
  %1027 = vmatpush1.msra.mxu0 %v1007
  %1028 = vmatprep.subr.mxu0 0.0
  %1029 = vmatpush1.msra.mxu0 %v1008
  %1030 = vmatprep.subr.mxu0 0.0
  %1031 = vmatpush1.msra.mxu0 %v1009
  %1032 = vmatprep.subr.mxu0 0.0
  %1033 = vmatpush1.msra.mxu0 %v1010
  %1034 = vmatprep.subr.mxu0 0.0
  %1035 = vmatpush1.msra.mxu0 %v1011
  %1036 = vmatprep.subr.mxu0 0.0
  %1037 = vmatpush1.msra.mxu0 0.0
  %1038 = vmatprep.subr.mxu0 0.0
  %1039 = vmatpush1.msra.mxu0 0.0
  %1040 = vmatprep.subr.mxu0 0.0
  %1041 = vmatpush1.msra.mxu0 0.0
  %1042 = vmatprep.subr.mxu0 0.0
  %1043 = vmatpush1.msra.mxu0 0.0
  %1044 = vmatprep.subr.mxu0 0.0
  %1045 = vmatpush1.msra.mxu0 0.0
  %1046 = vmatprep.subr.mxu0 0.0
  %1047 = vmatpush1.msra.mxu0 0.0
  %1048 = vmatprep.subr.mxu0 0.0
  %1049 = vmatpush1.msra.mxu0 0.0
  %1050 = vmatprep.subr.mxu0 0.0
  %1051 = vmatpush1.msra.mxu0 0.0
  %1052 = vmatprep.subr.mxu0 0.0
  %1053 = vmatpush1.msra.mxu0 0.0
  %1054 = vmatprep.subr.mxu0 0.0
  %1055 = vmatpush1.msra.mxu0 0.0
  %1056 = vmatprep.subr.mxu0 0.0
  %1057 = vmatpush1.msra.mxu0 0.0
  %1058 = vmatprep.subr.mxu0 0.0
  %1059 = vmatpush1.msra.mxu0 0.0
  %1060 = vmatprep.subr.mxu0 0.0
  %1061 = vmatpush1.msra.mxu0 0.0
  %1062 = vmatprep.subr.mxu0 0.0
  %1063 = vmatpush1.msra.mxu0 0.0
  %1064 = vmatprep.subr.mxu0 0.0
  %1065 = vmatpush1.msra.mxu0 0.0
  %1066 = vmatprep.subr.mxu0 0.0
  %1067 = vmatpush1.msra.mxu0 0.0
  %1068 = vmatprep.subr.mxu0 0.0
  %1069 = vmatpush1.msra.mxu0 0.0
  %1070 = vmatprep.subr.mxu0 0.0
  %1071 = vmatpush1.msra.mxu0 0.0
  %1072 = vmatprep.subr.mxu0 0.0
  %1073 = vmatpush1.msra.mxu0 0.0
  %1074 = vmatprep.subr.mxu0 0.0
  %1075 = vmatpush1.msra.mxu0 0.0
  %1076 = vmatprep.subr.mxu0 0.0
  %1077 = vmatpush1.msra.mxu0 0.0
  %1078 = vmatprep.subr.mxu0 0.0
  %1079 = vmatpush1.msra.mxu0 0.0
  %1080 = vmatprep.subr.mxu0 0.0
  %1081 = vmatpush1.msra.mxu0 0.0
  %1082 = vmatprep.subr.mxu0 0.0
  %1083 = vmatpush1.msra.mxu0 0.0
  %1084 = vmatprep.mubr.f32.mxu0 0.0
  %1085 = vmatmul.mubr.f32.gmra.mrb[0].mxu0 %v1015
  %v1086 = vpop.f32.mrb[0].mxu0
  %v1087 = vadd.f32 %v1012, %v1086
  %v1088 = vpop.f32.mrb[0].mxu0
  %1089 = vmatprep.mubr.f32.mxu0 0.0
  %1090 = vmatmul.mubr.f32.gmra.mrb[0].mxu0 %v1018
  %v1091 = vpop.f32.mrb[0].mxu0
  %v1092 = vadd.f32 %v1013, %v1091
  %v1093 = vpop.f32.mrb[0].mxu0
  %1094 = vdwg.mxu0
  %v1095 = vmul.f32 %v1087, 0.5
  %v1096 = vmul.f32 %v1092, 0.5
  %v1097 = vmul.f32 %v1087, 0.70710677
  %v1098 = vmul.f32 %v1092, 0.70710677
  %v1099 = verf.f32.pop %v1097
  %v1100 = verf.f32.pop %v1098
  %v1101 = vadd.f32 %v1099, 1.0
  %v1102 = vadd.f32 %v1100, 1.0
  %v1103 = vmul.f32 %v1095, %v1101
  %v1104 = vmul.f32 %v1096, %v1102
  %v1105 = vld [vmem:[%s1 + $0x1f0] sm:$0xff]
  %v1106 = vld [vmem:[%s1 + $0x1f8] sm:$0xff]
  %1115 = vrot.lane.b32.xlu0 %v1004, 64
  %v1116 = vpop.permute.xlu0 %1115
  %1117 = vrot.lane.b32.xlu0 %v1005, 64
  %v1118 = vpop.permute.xlu0 %1117
  %1119 = vrot.lane.b32.xlu0 %v1006, 64
  %v1120 = vpop.permute.xlu0 %1119
  %1121 = vrot.lane.b32.xlu0 %v1007, 64
  %v1122 = vpop.permute.xlu0 %1121
  %1123 = vrot.lane.b32.xlu0 %v1008, 64
  %v1124 = vpop.permute.xlu0 %1123
  %1125 = vrot.lane.b32.xlu0 %v1009, 64
  %v1126 = vpop.permute.xlu0 %1125
  %1127 = vrot.lane.b32.xlu0 %v1010, 64
  %v1128 = vpop.permute.xlu0 %1127
  %1129 = vrot.lane.b32.xlu0 %v1011, 64
  %v1130 = vpop.permute.xlu0 %1129
  %v1140 = vsel %vm111, %v1103, 0
  %v1143 = vsel %vm111, %v1104, 0
  %1145 = vmatprep.subr.mxu0 0.0
  %1146 = vmatpush1.msra.mxu0 %v1116
  %1147 = vmatprep.subr.mxu0 0.0
  %1148 = vmatpush1.msra.mxu0 %v1118
  %1149 = vmatprep.subr.mxu0 0.0
  %1150 = vmatpush1.msra.mxu0 %v1120
  %1151 = vmatprep.subr.mxu0 0.0
  %1152 = vmatpush1.msra.mxu0 %v1122
  %1153 = vmatprep.subr.mxu0 0.0
  %1154 = vmatpush1.msra.mxu0 %v1124
  %1155 = vmatprep.subr.mxu0 0.0
  %1156 = vmatpush1.msra.mxu0 %v1126
  %1157 = vmatprep.subr.mxu0 0.0
  %1158 = vmatpush1.msra.mxu0 %v1128
  %1159 = vmatprep.subr.mxu0 0.0
  %1160 = vmatpush1.msra.mxu0 %v1130
  %1161 = vmatprep.subr.mxu0 0.0
  %1162 = vmatpush1.msra.mxu0 0.0
  %1163 = vmatprep.subr.mxu0 0.0
  %1164 = vmatpush1.msra.mxu0 0.0
  %1165 = vmatprep.subr.mxu0 0.0
  %1166 = vmatpush1.msra.mxu0 0.0
  %1167 = vmatprep.subr.mxu0 0.0
  %1168 = vmatpush1.msra.mxu0 0.0
  %1169 = vmatprep.subr.mxu0 0.0
  %1170 = vmatpush1.msra.mxu0 0.0
  %1171 = vmatprep.subr.mxu0 0.0
  %1172 = vmatpush1.msra.mxu0 0.0
  %1173 = vmatprep.subr.mxu0 0.0
  %1174 = vmatpush1.msra.mxu0 0.0
  %1175 = vmatprep.subr.mxu0 0.0
  %1176 = vmatpush1.msra.mxu0 0.0
  %1177 = vmatprep.subr.mxu0 0.0
  %1178 = vmatpush1.msra.mxu0 0.0
  %1179 = vmatprep.subr.mxu0 0.0
  %1180 = vmatpush1.msra.mxu0 0.0
  %1181 = vmatprep.subr.mxu0 0.0
  %1182 = vmatpush1.msra.mxu0 0.0
  %1183 = vmatprep.subr.mxu0 0.0
  %1184 = vmatpush1.msra.mxu0 0.0
  %1185 = vmatprep.subr.mxu0 0.0
  %1186 = vmatpush1.msra.mxu0 0.0
  %1187 = vmatprep.subr.mxu0 0.0
  %1188 = vmatpush1.msra.mxu0 0.0
  %1189 = vmatprep.subr.mxu0 0.0
  %1190 = vmatpush1.msra.mxu0 0.0
  %1191 = vmatprep.subr.mxu0 0.0
  %1192 = vmatpush1.msra.mxu0 0.0
  %1193 = vmatprep.subr.mxu0 0.0
  %1194 = vmatpush1.msra.mxu0 0.0
  %1195 = vmatprep.subr.mxu0 0.0
  %1196 = vmatpush1.msra.mxu0 0.0
  %1197 = vmatprep.subr.mxu0 0.0
  %1198 = vmatpush1.msra.mxu0 0.0
  %1199 = vmatprep.subr.mxu0 0.0
  %1200 = vmatpush1.msra.mxu0 0.0
  %1201 = vmatprep.subr.mxu0 0.0
  %1202 = vmatpush1.msra.mxu0 0.0
  %1203 = vmatprep.subr.mxu0 0.0
  %1204 = vmatpush1.msra.mxu0 0.0
  %1205 = vmatprep.subr.mxu0 0.0
  %1206 = vmatpush1.msra.mxu0 0.0
  %1207 = vmatprep.subr.mxu0 0.0
  %1208 = vmatpush1.msra.mxu0 0.0
  %1209 = vmatprep.mubr.f32.mxu0 0.0
  %1210 = vmatmul.mubr.f32.gmra.mrb[0].mxu0 %v1140
  %v1211 = vpop.f32.mrb[0].mxu0
  %v1212 = vadd.f32 %v1105, %v1211
  %v1213 = vpop.f32.mrb[0].mxu0
  %1214 = vmatprep.mubr.f32.mxu0 0.0
  %1215 = vmatmul.mubr.f32.gmra.mrb[0].mxu0 %v1143
  %v1216 = vpop.f32.mrb[0].mxu0
  %v1217 = vadd.f32 %v1106, %v1216
  %v1218 = vpop.f32.mrb[0].mxu0
  %1219 = vdwg.mxu0
  %v1220 = vsel %vm111, %v1212, -inf
  %v1221 = vrot.slane %v1220, 4
  %v1222 = vmax.f32 %v1220, %v1221
  %v1223 = vrot.slane %v1222, 2
  %v1224 = vmax.f32 %v1222, %v1223
  %v1225 = vrot.slane %v1224, 1
  %v1226 = vmax.f32 %v1224, %v1225
  %v1227 = vsel %vm111, %v1217, -inf
  %v1228 = vrot.slane %v1227, 4
  %v1229 = vmax.f32 %v1227, %v1228
  %v1230 = vrot.slane %v1229, 2
  %v1231 = vmax.f32 %v1229, %v1230
  %v1232 = vrot.slane %v1231, 1
  %v1233 = vmax.f32 %v1231, %v1232
  %vm1234 = vcmask 1040384
  %v1235 = vsel %vm1234, %v1226, %v1233
  %v1236 = vld [vmem:[%s2 + $0x18] sm:$0xff]
  %v1237 = vld [vmem:[%s2 + $0x38] sm:$0xff]
  %v1238 = vld [vmem:[%s2 + $0x58] sm:$0xff]
  %v1239 = vld [vmem:[%s2 + $0x78] sm:$0xff]
  %v1240 = vld [vmem:[%s2 + $0x98] sm:$0xff]
  %v1241 = vld [vmem:[%s2 + $0xb8] sm:$0xff]
  %v1242 = vld [vmem:[%s2 + $0xd8] sm:$0xff]
  %v1243 = vld [vmem:[%s2 + $0xf8] sm:$0xff]
  %v1244 = vld [vmem:[%s1 + $0x200] sm:$0x3]
  %v1246 = vsel %vm111, %v1235, 0
  %1248 = vmatprep.subr.mxu0 0.0
  %1249 = vmatpush1.msra.mxu0 %v1236
  %1250 = vmatprep.subr.mxu0 0.0
  %1251 = vmatpush1.msra.mxu0 %v1237
  %1252 = vmatprep.subr.mxu0 0.0
  %1253 = vmatpush1.msra.mxu0 %v1238
  %1254 = vmatprep.subr.mxu0 0.0
  %1255 = vmatpush1.msra.mxu0 %v1239
  %1256 = vmatprep.subr.mxu0 0.0
  %1257 = vmatpush1.msra.mxu0 %v1240
  %1258 = vmatprep.subr.mxu0 0.0
  %1259 = vmatpush1.msra.mxu0 %v1241
  %1260 = vmatprep.subr.mxu0 0.0
  %1261 = vmatpush1.msra.mxu0 %v1242
  %1262 = vmatprep.subr.mxu0 0.0
  %1263 = vmatpush1.msra.mxu0 %v1243
  %1264 = vmatprep.subr.mxu0 0.0
  %1265 = vmatpush1.msra.mxu0 0.0
  %1266 = vmatprep.subr.mxu0 0.0
  %1267 = vmatpush1.msra.mxu0 0.0
  %1268 = vmatprep.subr.mxu0 0.0
  %1269 = vmatpush1.msra.mxu0 0.0
  %1270 = vmatprep.subr.mxu0 0.0
  %1271 = vmatpush1.msra.mxu0 0.0
  %1272 = vmatprep.subr.mxu0 0.0
  %1273 = vmatpush1.msra.mxu0 0.0
  %1274 = vmatprep.subr.mxu0 0.0
  %1275 = vmatpush1.msra.mxu0 0.0
  %1276 = vmatprep.subr.mxu0 0.0
  %1277 = vmatpush1.msra.mxu0 0.0
  %1278 = vmatprep.subr.mxu0 0.0
  %1279 = vmatpush1.msra.mxu0 0.0
  %1280 = vmatprep.subr.mxu0 0.0
  %1281 = vmatpush1.msra.mxu0 0.0
  %1282 = vmatprep.subr.mxu0 0.0
  %1283 = vmatpush1.msra.mxu0 0.0
  %1284 = vmatprep.subr.mxu0 0.0
  %1285 = vmatpush1.msra.mxu0 0.0
  %1286 = vmatprep.subr.mxu0 0.0
  %1287 = vmatpush1.msra.mxu0 0.0
  %1288 = vmatprep.subr.mxu0 0.0
  %1289 = vmatpush1.msra.mxu0 0.0
  %1290 = vmatprep.subr.mxu0 0.0
  %1291 = vmatpush1.msra.mxu0 0.0
  %1292 = vmatprep.subr.mxu0 0.0
  %1293 = vmatpush1.msra.mxu0 0.0
  %1294 = vmatprep.subr.mxu0 0.0
  %1295 = vmatpush1.msra.mxu0 0.0
  %1296 = vmatprep.subr.mxu0 0.0
  %1297 = vmatpush1.msra.mxu0 0.0
  %1298 = vmatprep.subr.mxu0 0.0
  %1299 = vmatpush1.msra.mxu0 0.0
  %1300 = vmatprep.subr.mxu0 0.0
  %1301 = vmatpush1.msra.mxu0 0.0
  %1302 = vmatprep.subr.mxu0 0.0
  %1303 = vmatpush1.msra.mxu0 0.0
  %1304 = vmatprep.subr.mxu0 0.0
  %1305 = vmatpush1.msra.mxu0 0.0
  %1306 = vmatprep.subr.mxu0 0.0
  %1307 = vmatpush1.msra.mxu0 0.0
  %1308 = vmatprep.subr.mxu0 0.0
  %1309 = vmatpush1.msra.mxu0 0.0
  %1310 = vmatprep.subr.mxu0 0.0
  %1311 = vmatpush1.msra.mxu0 0.0
  %1312 = vmatprep.mubr.f32.mxu0 0.0
  %1313 = vmatmul.mubr.f32.gmra.mrb[0].mxu0 %v1246
  %v1314 = vpop.f32.mrb[0].mxu0
  %v1315 = vadd.f32 %v1244, %v1314
  %v1316 = vpop.f32.mrb[0].mxu0
  %1317 = vdwg.mxu0
  %v1318 = vmax.f32 %v1315, 0.0
  %v1319 = vand.u32 2147483647, %v1315
  %v1320 = vsub.f32 0.0, %v1319
  %v1321 = vmul.f32 %v1320, 1.442695
  %v1322 = vpow.pop %v1321
  %v1323 = vadd.f32 %v1322, 1.0
  %v1324 = vlog2.pop %v1323
  %v1325 = vmul.f32 %v1324, 0.6931472
  %v1326 = vmul.f32 -0.5, %v1322
  %v1327 = vadd.f32 %v1326, 1.0
  %v1328 = vmul.f32 %v1327, %v1322
  %v1329 = vand.u32 2147483647, %v1322
  %vm1330 = vcmp.lt.f32.partialorder %v1329, 0.0004427343
  %v1331 = vsel %vm1330, %v1328, %v1325
  %v1332 = vadd.f32 %v1318, %v1331
  %v1333 = vlaneseq
  %v1334 = vand.u32 %v1333, 127
  %vm1335 = vcmp.eq.s32.totalorder %v1334, 0
  %vm1336 = vcmp.eq.s32.totalorder %v1334, 2
  %v1337 = vadd.f32 %v1332, 1.0
  %v1338 = vsel %vm1336, %v1337, %v1332
  %v1339 = vsel %vm1335, %v1315, %v1338
  %v1340 = vsel %vm111, %v1339, 0.0
  %vm1341 = vcmask 1041408
  %v1342 = vsel %vm1341, %v1340, 0.0
  %1343 = vst [vmem:[%s3] sm:$0xff] %v1342
  // Predicated region
  $region14: #{spectf_der_forward.1} parent=0 // pred_check
    _
  $region15: #{spectf_der_forward.1} parent=0 // pred_check_branch
    %1345 = sbr.rel (0) target = $region17
  $region16: #{spectf_der_forward.1} parent=0 // pred_region
    _
  $region17: #{spectf_der_forward.1} parent=0 // pred_fallthru
    _
  // Predicated region
  $region18: #{spectf_der_forward.1} parent=0 // pred_check
    _
  $region19: #{spectf_der_forward.1} parent=0 // pred_check_branch
    %1347 = sbr.rel (0) target = $region21
  $region20: #{spectf_der_forward.1} parent=0 // pred_region
    _
  $region21: #{spectf_der_forward.1} parent=0 // pred_fallthru
    _

</llo_original>
